<compile_context>
chip_gen: v7x
topology: tpu7x:2x2x1
jax: 0.10.0
libtpu: 0.0.40
codegen_flags: <defaults>
</compile_context>

<pallas_src>
import jax
import jax.numpy as jnp
from jax.experimental import pallas as pl
from jax.experimental.pallas import tpu as pltpu


def _round_up(n, m):
    return (n + m - 1) // m * m


def _pad2(a, rows, cols):
    return jnp.pad(a, ((0, rows - a.shape[0]), (0, cols - a.shape[1])))


def _vmem_limit_bytes():
    """~3/4 of this generation's physical VMEM, conservatively clamped."""
    try:
        cap = int(pltpu.get_tpu_info().vmem_capacity_bytes)
    except Exception:
        cap = 64 << 20  # conservative fallback (v7x-sized VMEM)
    return int(min(max(cap * 3 // 4, 32 << 20), 100 << 20))


def _pick_tq(HW, HWqp, Cp, Cip, vmem_limit_bytes):
    """Largest MXU-friendly divisor of HW whose per-tile live set fits VMEM after
    subtracting the fixed residents (xwin block, weights, phi/g scratch, pg temp)."""
    fixed = (2 * 2 * 4 * HWqp * Cp                            # xwin bf16 block, double-buffered
             + 2 * 2 * (Cp * Cip + Cp * 2 * Cip + Cip * Cp)   # bf16 weights (double-buffered)
             + 2 * 4 * (Cip + 2 * Cip + Cp)                    # f32 biases (double-buffered)
             + 2 * 2 * HWqp * Cip                              # phi^T + g bf16 scratch
             + 4 * 4 * HWqp * 2 * Cip                          # pg f32 temp (tile-0 peak)
             + 4 * HWqp * 2 * Cip)                             # pooled m f32 temp
    per_row = (2 * 4 * Cp + 2 * 4 * Cp                         # x2d + out f32 blocks (dbl-buf)
               + 4 * Cip + 4 * Cp                              # theta + wy f32
               + 4 * HWqp + 2 * HWqp                           # f f32 + p bf16
               + 2 * (Cp + Cip))                               # bf16 casts of x_t / theta
    budget = vmem_limit_bytes - fixed - (2 << 20)              # ~2 MiB headroom
    cap = max(8, budget // per_row)
    hi = min(cap, HW)
    for align in (256, 128, 64, 32, 16, 8):                    # prefer MXU-friendly tiles
        d = (hi // align) * align
        while d >= align:
            if HW % d == 0:
                return d
            d -= align
    return HW


def nonlocal_block_pallas(x, params, eps=1e-5, tq=None):
    """x: (B, C, H, W) float32 (NCHW, as in PyTorch). Returns (B, C, H, W)."""
    B, C, H, W = x.shape
    Ci = params["wth"].shape[0]
    assert H % 2 == 0 and W % 2 == 0, "2x2 max-pool needs even H, W"
    HW, HWq = H * W, (H // 2) * (W // 2)
    Cp, Cip = _round_up(C, 128), _round_up(Ci, 128)   # lane-dense channel padding
    HWqp = _round_up(HWq, 128)                        # lane-dense pooled-key axis

    vmem_limit = _vmem_limit_bytes()
    TQ = _pick_tq(HW, HWqp, Cp, Cip, vmem_limit) if tq is None else tq
    assert HW % TQ == 0 and (TQ % 8 == 0 or TQ == HW)
    n_tiles = HW // TQ

    # ---- glue: NCHW -> channels-last, one channel-pad pass, flattened spatial ----
    x_nhwc = jnp.pad(jnp.transpose(x, (0, 2, 3, 1)),
                     ((0, 0), (0, 0), (0, 0), (0, Cp - C)))               # (B,H,W,Cp)
    x2d = x_nhwc.reshape(B, HW, Cp)                                       # f32 (residual)
    # 4 positions of every 2x2 window; each slab padded to HWqp rows; bf16 for the MXU.
    xwin = (x_nhwc.reshape(B, H // 2, 2, W // 2, 2, Cp)
                  .transpose(0, 2, 4, 1, 3, 5)
                  .reshape(B, 4, HWq, Cp))
    xwin = jnp.pad(xwin, ((0, 0), (0, 0), (0, HWqp - HWq), (0, 0)))
    xwin = xwin.reshape(B, 4 * HWqp, Cp).astype(jnp.bfloat16)

    # ---- fold eval-mode BatchNorm into the W 1x1 conv ----
    scale = params["gamma"] / jnp.sqrt(params["var"] + eps)
    ww_eff = params["ww"] * scale[:, None]                                # (C, Ci)
    bw_eff = (params["bw"] - params["mean"]) * scale + params["beta"]     # (C,)

    # ---- pre-transpose / zero-pad weights to (C_in, C_out), bf16; fuse phi & g ----
    wth_t = _pad2(params["wth"].T, Cp, Cip).astype(jnp.bfloat16)          # (Cp, Cip)
    wphg = jnp.concatenate([_pad2(params["wph"].T, Cp, Cip),
                            _pad2(params["wg"].T, Cp, Cip)],
                           axis=1).astype(jnp.bfloat16)                   # (Cp, 2*Cip)
    ww_t = _pad2(ww_eff.T, Cip, Cp).astype(jnp.bfloat16)                  # (Cip, Cp)
    pad1 = lambda v, n: jnp.pad(v, (0, n - v.shape[0]))[None, :]          # f32 biases
    bth = pad1(params["bth"], Cip)
    bphg = jnp.concatenate([pad1(params["bph"], Cip), pad1(params["bg"], Cip)], axis=1)
    bw = pad1(bw_eff, Cp)

    def kernel(x_ref, xwin_ref, wth_ref, bth_ref, wphg_ref, bphg_ref,
               ww_ref, bw_ref, out_ref, phi_t_scr, g_scr):
        # Once per image: fused phi/g 1x1 conv (one bf16 matmul) + 2x2 max-pool -> bf16 scratch.
        @pl.when(pl.program_id(1) == 0)
        def _():
            pg = jnp.dot(xwin_ref[0], wphg_ref[...],
                         preferred_element_type=jnp.float32)              # (4*HWqp, 2Cip) f32
            m = jnp.maximum(jnp.maximum(pg[:HWqp], pg[HWqp:2 * HWqp]),
                            jnp.maximum(pg[2 * HWqp:3 * HWqp], pg[3 * HWqp:]))
            m = (m + bphg_ref[...]).astype(jnp.bfloat16)                  # (HWqp, 2Cip) bf16
            # cast BEFORE the transpose (halves XLU traffic on the tile-0 critical path)
            phi_t_scr[...] = jnp.transpose(m[:, :Cip])                    # (Cip, HWqp)
            g_scr[...] = m[:, Cip:]                                       # (HWqp, Cip)

        x_t = x_ref[0]                                                    # (TQ, Cp) f32
        theta = jnp.dot(x_t.astype(jnp.bfloat16), wth_ref[...],
                        preferred_element_type=jnp.float32) + bth_ref[...]    # (TQ, Cip)
        # f[i, j] = <theta[i], phi[j]>  (bf16 operands, f32 accumulate on the MXU)
        f = jnp.dot(theta.astype(jnp.bfloat16), phi_t_scr[...],
                    preferred_element_type=jnp.float32)                   # (TQ, HWqp)
        if HWqp > HWq:
            # mask padded key columns so no softmax mass leaks into the lane padding
            col = jax.lax.broadcasted_iota(jnp.int32, (TQ, HWqp), 1)
            f = jnp.where(col < HWq, f, jnp.float32(-1e30))
        f = f - jnp.max(f, axis=-1, keepdims=True)
        p = jnp.exp(f.astype(jnp.bfloat16))                               # bf16 exponent (EUP)
        inv = pl.reciprocal(jnp.sum(p, axis=-1, keepdims=True, dtype=jnp.float32),
                            approx=True)                                  # (TQ, 1) f32
        # y = softmax(f) @ g, normalization folded into the (TQ, Cip) output
        y = jnp.dot(p, g_scr[...], preferred_element_type=jnp.float32) * inv
        # W 1x1 conv (BN folded in) + residual
        wy = jnp.dot(y.astype(jnp.bfloat16), ww_ref[...],
                     preferred_element_type=jnp.float32) + bw_ref[...]    # (TQ, Cp)
        out_ref[0] = wy + x_t

    full = lambda shape: pl.BlockSpec(shape, lambda b, t, _n=len(shape): (0,) * _n)

    out = pl.pallas_call(
        kernel,
        out_shape=jax.ShapeDtypeStruct((B, HW, Cp), jnp.float32),
        grid=(B, n_tiles),
        in_specs=[
            pl.BlockSpec((1, TQ, Cp), lambda b, t: (b, t, 0)),
            pl.BlockSpec((1, 4 * HWqp, Cp), lambda b, t: (b, 0, 0)),  # fetched once/image
            full((Cp, Cip)), full((1, Cip)),
            full((Cp, 2 * Cip)), full((1, 2 * Cip)),
            full((Cip, Cp)), full((1, Cp)),
        ],
        out_specs=pl.BlockSpec((1, TQ, Cp), lambda b, t: (b, t, 0)),
        scratch_shapes=[pltpu.VMEM((Cip, HWqp), jnp.bfloat16),   # phi^T, per-image
                        pltpu.VMEM((HWqp, Cip), jnp.bfloat16)],  # g,     per-image
        compiler_params=pltpu.CompilerParams(
            # tile axis carries the per-image scratch -> "arbitrary";
            # batch axis shards across TensorCores (v7x megacore).
            dimension_semantics=("parallel", "arbitrary"),
            vmem_limit_bytes=vmem_limit),
    )(x2d, xwin, wth_t, bth, wphg, bphg, ww_t, bw)

    return jnp.transpose(out[:, :, :C].reshape(B, H, W, C), (0, 3, 1, 2))


def nonlocal_block_ref(x, params, eps=1e-5):
    """Pure-JAX reference mirroring the PyTorch forward (eval-mode BN)."""
    B, C, H, W = x.shape
    Ci = params["wth"].shape[0]

    def conv1x1(t, w, b):
        return jnp.einsum("bchw,oc->bohw", t, w) + b[None, :, None, None]

    def maxpool2(t):
        b, c, h, w = t.shape
        return jnp.max(t.reshape(b, c, h // 2, 2, w // 2, 2), axis=(3, 5))

    g_x = maxpool2(conv1x1(x, params["wg"], params["bg"]))
    g_x = g_x.reshape(B, Ci, -1).transpose(0, 2, 1)                     # (B, HWq, Ci)
    theta = conv1x1(x, params["wth"], params["bth"]).reshape(B, Ci, -1)
    theta = theta.transpose(0, 2, 1)                                    # (B, HW, Ci)
    phi = maxpool2(conv1x1(x, params["wph"], params["bph"]))
    phi = phi.reshape(B, Ci, -1)                                        # (B, Ci, HWq)
    f = jnp.einsum("bqc,bck->bqk", theta, phi)
    f_div_c = jax.nn.softmax(f, axis=-1)
    y = jnp.einsum("bqk,bkc->bqc", f_div_c, g_x)
    y = y.transpose(0, 2, 1).reshape(B, Ci, H, W)
    w_y = conv1x1(y, params["ww"], params["bw"])
    scale = params["gamma"] / jnp.sqrt(params["var"] + eps)
    w_y = ((w_y - params["mean"][None, :, None, None])
           * scale[None, :, None, None] + params["beta"][None, :, None, None])
    return w_y + x


def make_params(in_channels, inter_channels, key):
    ks = jax.random.split(key, 10)
    n = lambda k, shp, s=0.3: s * jax.random.normal(k, shp, jnp.float32)
    return {
        "wg":  n(ks[0], (inter_channels, in_channels)),
        "bg":  n(ks[1], (inter_channels,), 0.1),
        "wth": n(ks[2], (inter_channels, in_channels)),
        "bth": n(ks[3], (inter_channels,), 0.1),
        "wph": n(ks[4], (inter_channels, in_channels)),
        "bph": n(ks[5], (inter_channels,), 0.1),
        "ww":  n(ks[6], (in_channels, inter_channels)),
        "bw":  n(ks[7], (in_channels,), 0.1),
        "gamma": 1.0 + n(ks[8], (in_channels,), 0.1),
        "beta":  n(ks[9], (in_channels,), 0.1),
        "mean":  jnp.zeros((in_channels,), jnp.float32),
        "var":   jnp.ones((in_channels,), jnp.float32),
    }


if __name__ == "__main__":
    B, C, H, W = 2, 4, 16, 16
    Ci = C // 2  # inter_channels = in_channels // 2 (as in __init__)

    kx, kp = jax.random.split(jax.random.PRNGKey(0))
    x = jax.random.normal(kx, (B, C, H, W), jnp.float32)
    params = make_params(C, Ci, kp)

    ref = jax.block_until_ready(nonlocal_block_ref(x, params))

    # tq=64 -> 4 query tiles per image: exercises the once-per-image scratch path and,
    # with HWq=64 padded to 128, the masked-softmax padded-key path.
    out = jax.block_until_ready(nonlocal_block_pallas(x, params, tq=64))
    assert out.shape == (B, C, H, W)
    err = float(jnp.max(jnp.abs(out - ref)))
    # bf16 matmuls + bf16 exp + EUP approx reciprocal -> looser tolerance than pure f32
    assert jnp.allclose(out, ref, atol=3e-2, rtol=3e-2), err

    # default (VMEM-budgeted, MXU-aligned) tile selection
    out2 = jax.block_until_ready(nonlocal_block_pallas(x, params))
    err2 = float(jnp.max(jnp.abs(out2 - ref)))
    assert jnp.allclose(out2, ref, atol=3e-2, rtol=3e-2), err2

    print("KERNEL_OK")
</pallas_src>

<mosaic_0001>
module attributes {stable_mosaic.version = 11 : i64} {
  func.func @kernel(%arg0: i32, %arg1: i32, %arg2: memref<1x64x128xf32, #tpu.memory_space<vmem>>, %arg3: memref<1x512x128xbf16, #tpu.memory_space<vmem>>, %arg4: memref<128x128xbf16, #tpu.memory_space<vmem>>, %arg5: memref<1x128xf32, #tpu.memory_space<vmem>>, %arg6: memref<128x256xbf16, #tpu.memory_space<vmem>>, %arg7: memref<1x256xf32, #tpu.memory_space<vmem>>, %arg8: memref<128x128xbf16, #tpu.memory_space<vmem>>, %arg9: memref<1x128xf32, #tpu.memory_space<vmem>>, %arg10: memref<1x64x128xf32, #tpu.memory_space<vmem>>, %arg11: memref<128x128xbf16, #tpu.memory_space<vmem>>, %arg12: memref<128x128xbf16, #tpu.memory_space<vmem>>) attributes {dimension_semantics = [#tpu.dimension_semantics<parallel>, #tpu.dimension_semantics<arbitrary>], iteration_bounds = array<i64: 2, 4>, scalar_prefetch = 0 : i64, scratch_operands = 2 : i64, tpu.core_type = #tpu.core_type<tc>, window_params = [{transform_indices = @transform_0, window_bounds = array<i64: 1, 64, 128>}, {transform_indices = @transform_1, window_bounds = array<i64: 1, 512, 128>}, {pipeline_mode = #tpu.pipeline_mode<synchronous>, transform_indices = @transform_2, window_bounds = array<i64: 128, 128>}, {pipeline_mode = #tpu.pipeline_mode<synchronous>, transform_indices = @transform_3, window_bounds = array<i64: 1, 128>}, {pipeline_mode = #tpu.pipeline_mode<synchronous>, transform_indices = @transform_4, window_bounds = array<i64: 128, 256>}, {pipeline_mode = #tpu.pipeline_mode<synchronous>, transform_indices = @transform_5, window_bounds = array<i64: 1, 256>}, {pipeline_mode = #tpu.pipeline_mode<synchronous>, transform_indices = @transform_6, window_bounds = array<i64: 128, 128>}, {pipeline_mode = #tpu.pipeline_mode<synchronous>, transform_indices = @transform_7, window_bounds = array<i64: 1, 128>}, {transform_indices = @transform_8, window_bounds = array<i64: 1, 64, 128>}]} {
    %c0_i32 = arith.constant 0 : i32
    %0 = arith.cmpi eq, %arg1, %c0_i32 : i32
    %1 = arith.extui %0 : i1 to i32
    %c0_i32_0 = arith.constant 0 : i32
    %2 = arith.cmpi ne, %1, %c0_i32_0 : i32
    scf.if %2 {
      %c0_24 = arith.constant 0 : index
      %c0_25 = arith.constant 0 : index
      %c0_26 = arith.constant 0 : index
      %43 = vector.load %arg3[%c0_24, %c0_25, %c0_26] : memref<1x512x128xbf16, #tpu.memory_space<vmem>>, vector<1x512x128xbf16>
      %44 = vector.shape_cast %43 : vector<1x512x128xbf16> to vector<512x128xbf16>
      %c0_27 = arith.constant 0 : index
      %c0_28 = arith.constant 0 : index
      %45 = vector.load %arg6[%c0_27, %c0_28] : memref<128x256xbf16, #tpu.memory_space<vmem>>, vector<128x256xbf16>
      %cst_29 = arith.constant dense<0.000000e+00> : vector<512x256xf32>
      %46 = tpu.matmul %44, %45, %cst_29 {dimension_numbers = #tpu.dot_dimension_numbers<[1], [0], [0], [1], [0, 0, 1, 1], [], []>} : vector<512x128xbf16>, vector<128x256xbf16>, vector<512x256xf32> -> vector<512x256xf32>
      %47 = vector.extract_strided_slice %46 {offsets = [0, 0], sizes = [128, 256], strides = [1, 1]} : vector<512x256xf32> to vector<128x256xf32>
      %48 = vector.extract_strided_slice %46 {offsets = [128, 0], sizes = [128, 256], strides = [1, 1]} : vector<512x256xf32> to vector<128x256xf32>
      %49 = arith.maximumf %47, %48 : vector<128x256xf32>
      %50 = vector.extract_strided_slice %46 {offsets = [256, 0], sizes = [128, 256], strides = [1, 1]} : vector<512x256xf32> to vector<128x256xf32>
      %51 = vector.extract_strided_slice %46 {offsets = [384, 0], sizes = [128, 256], strides = [1, 1]} : vector<512x256xf32> to vector<128x256xf32>
      %52 = arith.maximumf %50, %51 : vector<128x256xf32>
      %53 = arith.maximumf %49, %52 : vector<128x256xf32>
      %c0_30 = arith.constant 0 : index
      %c0_31 = arith.constant 0 : index
      %54 = vector.load %arg7[%c0_30, %c0_31] : memref<1x256xf32, #tpu.memory_space<vmem>>, vector<1x256xf32>
      %55 = vector.broadcast %54 : vector<1x256xf32> to vector<128x256xf32>
      %56 = arith.addf %53, %55 : vector<128x256xf32>
      %57 = arith.truncf %56 : vector<128x256xf32> to vector<128x256xbf16>
      %58 = vector.extract_strided_slice %57 {offsets = [0, 0], sizes = [128, 128], strides = [1, 1]} : vector<128x256xbf16> to vector<128x128xbf16>
      %59 = tpu.transpose %58, [1, 0] : vector<128x128xbf16> -> vector<128x128xbf16>
      %c0_32 = arith.constant 0 : index
      %c0_33 = arith.constant 0 : index
      %60 = vector.load %arg11[%c0_32, %c0_33] : memref<128x128xbf16, #tpu.memory_space<vmem>>, vector<128x128xbf16>
      tpu.vector_store %arg11[%c0_32, %c0_33], %59 {strides = array<i32>} : memref<128x128xbf16, #tpu.memory_space<vmem>>, vector<128x128xbf16>,
      %61 = vector.extract_strided_slice %57 {offsets = [0, 128], sizes = [128, 128], strides = [1, 1]} : vector<128x256xbf16> to vector<128x128xbf16>
      %c0_34 = arith.constant 0 : index
      %c0_35 = arith.constant 0 : index
      %62 = vector.load %arg12[%c0_34, %c0_35] : memref<128x128xbf16, #tpu.memory_space<vmem>>, vector<128x128xbf16>
      tpu.vector_store %arg12[%c0_34, %c0_35], %61 {strides = array<i32>} : memref<128x128xbf16, #tpu.memory_space<vmem>>, vector<128x128xbf16>,
    } else {
    }
    %c0 = arith.constant 0 : index
    %c0_1 = arith.constant 0 : index
    %c0_2 = arith.constant 0 : index
    %3 = vector.load %arg2[%c0, %c0_1, %c0_2] : memref<1x64x128xf32, #tpu.memory_space<vmem>>, vector<1x64x128xf32>
    %4 = vector.shape_cast %3 : vector<1x64x128xf32> to vector<64x128xf32>
    %5 = arith.truncf %4 : vector<64x128xf32> to vector<64x128xbf16>
    %c0_3 = arith.constant 0 : index
    %c0_4 = arith.constant 0 : index
    %6 = vector.load %arg4[%c0_3, %c0_4] : memref<128x128xbf16, #tpu.memory_space<vmem>>, vector<128x128xbf16>
    %cst = arith.constant dense<0.000000e+00> : vector<64x128xf32>
    %7 = tpu.matmul %5, %6, %cst {dimension_numbers = #tpu.dot_dimension_numbers<[1], [0], [0], [1], [0, 0, 1, 1], [], []>} : vector<64x128xbf16>, vector<128x128xbf16>, vector<64x128xf32> -> vector<64x128xf32>
    %c0_5 = arith.constant 0 : index
    %c0_6 = arith.constant 0 : index
    %8 = vector.load %arg5[%c0_5, %c0_6] : memref<1x128xf32, #tpu.memory_space<vmem>>, vector<1x128xf32>
    %9 = vector.broadcast %8 : vector<1x128xf32> to vector<64x128xf32>
    %10 = arith.addf %7, %9 : vector<64x128xf32>
    %11 = arith.truncf %10 : vector<64x128xf32> to vector<64x128xbf16>
    %c0_7 = arith.constant 0 : index
    %c0_8 = arith.constant 0 : index
    %12 = vector.load %arg11[%c0_7, %c0_8] : memref<128x128xbf16, #tpu.memory_space<vmem>>, vector<128x128xbf16>
    %cst_9 = arith.constant dense<0.000000e+00> : vector<64x128xf32>
    %13 = tpu.matmul %11, %12, %cst_9 {dimension_numbers = #tpu.dot_dimension_numbers<[1], [0], [0], [1], [0, 0, 1, 1], [], []>} : vector<64x128xbf16>, vector<128x128xbf16>, vector<64x128xf32> -> vector<64x128xf32>
    %14 = tpu.iota {dimensions = array<i32: 1>} : vector<64x128xi32>
    %c64_i32 = arith.constant 64 : i32
    %15 = vector.broadcast %c64_i32 : i32 to vector<64x128xi32>
    %16 = arith.cmpi slt, %14, %15 : vector<64x128xi32>
    %cst_10 = arith.constant -1.000000e+30 : f32
    %17 = vector.broadcast %cst_10 : f32 to vector<64x128xf32>
    %18 = arith.select %16, %13, %17 : vector<64x128xi1>, vector<64x128xf32>
    %cst_11 = arith.constant dense<0xFF800000> : vector<64xf32>
    %19 = vector.multi_reduction <maximumf>, %18, %cst_11 [1] : vector<64x128xf32> to vector<64xf32>
    %20 = vector.shape_cast %19 : vector<64xf32> to vector<64x1xf32>
    %21 = vector.broadcast %20 : vector<64x1xf32> to vector<64x128xf32>
    %22 = arith.subf %18, %21 : vector<64x128xf32>
    %23 = arith.truncf %22 : vector<64x128xf32> to vector<64x128xbf16>
    %24 = math.exp %23 : vector<64x128xbf16>
    %25 = arith.extf %24 : vector<64x128xbf16> to vector<64x128xf32>
    %cst_12 = arith.constant dense<0.000000e+00> : vector<64xf32>
    %26 = vector.multi_reduction <add>, %25, %cst_12 [1] : vector<64x128xf32> to vector<64xf32>
    %27 = vector.shape_cast %26 : vector<64xf32> to vector<64x1xf32>
    %28 = tpu.reciprocal %27 {approx = true} : vector<64x1xf32> -> vector<64x1xf32>
    %c0_13 = arith.constant 0 : index
    %c0_14 = arith.constant 0 : index
    %29 = vector.load %arg12[%c0_13, %c0_14] : memref<128x128xbf16, #tpu.memory_space<vmem>>, vector<128x128xbf16>
    %cst_15 = arith.constant dense<0.000000e+00> : vector<64x128xf32>
    %30 = tpu.matmul %24, %29, %cst_15 {dimension_numbers = #tpu.dot_dimension_numbers<[1], [0], [0], [1], [0, 0, 1, 1], [], []>} : vector<64x128xbf16>, vector<128x128xbf16>, vector<64x128xf32> -> vector<64x128xf32>
    %31 = vector.broadcast %28 : vector<64x1xf32> to vector<64x128xf32>
    %32 = arith.mulf %30, %31 : vector<64x128xf32>
    %33 = arith.truncf %32 : vector<64x128xf32> to vector<64x128xbf16>
    %c0_16 = arith.constant 0 : index
    %c0_17 = arith.constant 0 : index
    %34 = vector.load %arg8[%c0_16, %c0_17] : memref<128x128xbf16, #tpu.memory_space<vmem>>, vector<128x128xbf16>
    %cst_18 = arith.constant dense<0.000000e+00> : vector<64x128xf32>
    %35 = tpu.matmul %33, %34, %cst_18 {dimension_numbers = #tpu.dot_dimension_numbers<[1], [0], [0], [1], [0, 0, 1, 1], [], []>} : vector<64x128xbf16>, vector<128x128xbf16>, vector<64x128xf32> -> vector<64x128xf32>
    %c0_19 = arith.constant 0 : index
    %c0_20 = arith.constant 0 : index
    %36 = vector.load %arg9[%c0_19, %c0_20] : memref<1x128xf32, #tpu.memory_space<vmem>>, vector<1x128xf32>
    %37 = vector.broadcast %36 : vector<1x128xf32> to vector<64x128xf32>
    %38 = arith.addf %35, %37 : vector<64x128xf32>
    %39 = arith.addf %38, %4 : vector<64x128xf32>
    %c0_21 = arith.constant 0 : index
    %c0_22 = arith.constant 0 : index
    %c0_23 = arith.constant 0 : index
    %40 = vector.load %arg10[%c0_21, %c0_22, %c0_23] : memref<1x64x128xf32, #tpu.memory_space<vmem>>, vector<1x64x128xf32>
    %41 = vector.shape_cast %40 : vector<1x64x128xf32> to vector<64x128xf32>
    %42 = vector.shape_cast %39 : vector<64x128xf32> to vector<1x64x128xf32>
    tpu.vector_store %arg10[%c0_21, %c0_22, %c0_23], %42 {strides = array<i32>} : memref<1x64x128xf32, #tpu.memory_space<vmem>>, vector<1x64x128xf32>,
    return
  }
  func.func @transform_0(%arg0: i32, %arg1: i32) -> (i32, i32, i32) {
    %c0_i32 = arith.constant 0 : i32
    %c0_i32_0 = arith.constant 0 : i32
    return %arg0, %arg1, %c0_i32 : i32, i32, i32
  }
  func.func @transform_1(%arg0: i32, %arg1: i32) -> (i32, i32, i32) {
    %c0_i32 = arith.constant 0 : i32
    %c0_i32_0 = arith.constant 0 : i32
    %c0_i32_1 = arith.constant 0 : i32
    return %arg0, %c0_i32, %c0_i32_0 : i32, i32, i32
  }
  func.func @transform_2(%arg0: i32, %arg1: i32) -> (i32, i32) {
    %c0_i32 = arith.constant 0 : i32
    %c0_i32_0 = arith.constant 0 : i32
    %c0_i32_1 = arith.constant 0 : i32
    return %c0_i32, %c0_i32_0 : i32, i32
  }
  func.func @transform_3(%arg0: i32, %arg1: i32) -> (i32, i32) {
    %c0_i32 = arith.constant 0 : i32
    %c0_i32_0 = arith.constant 0 : i32
    %c0_i32_1 = arith.constant 0 : i32
    return %c0_i32, %c0_i32_0 : i32, i32
  }
  func.func @transform_4(%arg0: i32, %arg1: i32) -> (i32, i32) {
    %c0_i32 = arith.constant 0 : i32
    %c0_i32_0 = arith.constant 0 : i32
    %c0_i32_1 = arith.constant 0 : i32
    return %c0_i32, %c0_i32_0 : i32, i32
  }
  func.func @transform_5(%arg0: i32, %arg1: i32) -> (i32, i32) {
    %c0_i32 = arith.constant 0 : i32
    %c0_i32_0 = arith.constant 0 : i32
    %c0_i32_1 = arith.constant 0 : i32
    return %c0_i32, %c0_i32_0 : i32, i32
  }
  func.func @transform_6(%arg0: i32, %arg1: i32) -> (i32, i32) {
    %c0_i32 = arith.constant 0 : i32
    %c0_i32_0 = arith.constant 0 : i32
    %c0_i32_1 = arith.constant 0 : i32
    return %c0_i32, %c0_i32_0 : i32, i32
  }
  func.func @transform_7(%arg0: i32, %arg1: i32) -> (i32, i32) {
    %c0_i32 = arith.constant 0 : i32
    %c0_i32_0 = arith.constant 0 : i32
    %c0_i32_1 = arith.constant 0 : i32
    return %c0_i32, %c0_i32_0 : i32, i32
  }
  func.func @transform_8(%arg0: i32, %arg1: i32) -> (i32, i32, i32) {
    %c0_i32 = arith.constant 0 : i32
    %c0_i32_0 = arith.constant 0 : i32
    return %arg0, %arg1, %c0_i32 : i32, i32, i32
  }
}

</mosaic_0001>

<llo_original>
// kernel: tpu_custom_call.1
$region0: #{tpu_custom_call.1}
  #allocation0 [shape = 'u32[]', space=smem, size = 0x4, offset = 0x4, fixed_abs, tag = 'smem constant byte address 0x4 - core index']
  #allocation1 [shape = 'u32[144,128]{1,0:T(1,128)}', space=vmem, size = 0x12000, scoped, tag = 'internal scratch']
  #allocation2 [shape = 'bf16[128,128]{1,0:T(16,128)(2,1)}', space=vmem, size = 0x8000, scoped, tag = 'scratch operand']
  #allocation3 [shape = 'bf16[128,128]{1,0:T(16,128)(2,1)}', space=vmem, size = 0x8000, scoped, tag = 'scratch operand']
  %s0 = inlined_call_operand.hbm [shape: f32[2,256,128], index: 0, kind: input, shape index: {}]
  %s1 = inlined_call_operand.hbm [shape: bf16[2,512,128], index: 1, kind: input, shape index: {}]
  %s2 = inlined_call_operand.hbm [shape: bf16[128,128], index: 2, kind: input, shape index: {}]
  %s3 = inlined_call_operand.vmem [shape: f32[1,128], index: 3, kind: input, shape index: {}]
  %s4 = inlined_call_operand.hbm [shape: bf16[128,256], index: 4, kind: input, shape index: {}]
  %s5 = inlined_call_operand.vmem [shape: f32[1,256], index: 5, kind: input, shape index: {}]
  %s6 = inlined_call_operand.hbm [shape: bf16[128,128], index: 6, kind: input, shape index: {}]
  %s7 = inlined_call_operand.vmem [shape: f32[1,128], index: 7, kind: input, shape index: {}]
  %s8 = inlined_call_operand.hbm [shape: f32[2,256,128], index: 8, kind: output, shape index: {}]
  %s9 = sld [smem:[#allocation0]]
  $region89: #{tpu_custom_call.1} parent=0
    _
  %s11 = ssub.s32 1, %s9
  %s12 = scalar_select 0, %s11, %s9
  $region1: #{tpu_custom_call.1} parent=0
    #allocation4 [shape = 'u8[65536]{0}', space=vmem, size = 0x10000, scoped, tag = 'input window, operand 0']
    #allocation5 [shape = 's32[2]{0}', space=sflag, size = 0x8, scoped, tag = 'scoped memory for tpu_custom_call.1']
    #allocation6 [shape = 's32[2]{0}', space=sflag, size = 0x8, scoped, tag = 'scoped memory for tpu_custom_call.1']
    #allocation7 [shape = 'u8[262144]{0}', space=vmem, size = 0x40000, scoped, tag = 'input window, operand 1']
    #allocation8 [shape = 's32[2]{0}', space=sflag, size = 0x8, scoped, tag = 'scoped memory for tpu_custom_call.1']
    #allocation9 [shape = 'u8[32768]{0}', space=vmem, size = 0x8000, scoped, tag = 'input window, operand 2, single buffered']
    #allocation10 [shape = 'u8[65536]{0}', space=vmem, size = 0x10000, scoped, tag = 'input window, operand 4, single buffered']
    #allocation11 [shape = 's32[1]{0}', space=sflag, size = 0x4, scoped, tag = 'scoped memory for tpu_custom_call.1']
    #allocation12 [shape = 'u8[32768]{0}', space=vmem, size = 0x8000, scoped, tag = 'input window, operand 6, single buffered']
    #allocation13 [shape = 'u8[65536]{0}', space=vmem, size = 0x10000, scoped, tag = 'output window, operand 0']
    %13 = vsyncpa [#allocation5], 0
    %s14 = scalar_lea.sflag [#allocation5], 1
    %15 = vsyncpa %s14, 0
    %16 = vsyncpa [#allocation8], 0
    %s17 = scalar_lea.sflag [#allocation8], 1
    %18 = vsyncpa %s17, 0
    %19 = vsyncpa [#allocation11], 0
    %20 = vsyncpa [#allocation6], 0
    %s21 = scalar_lea.sflag [#allocation6], 1
    %22 = vsyncpa %s21, 0
    loop: start=0, step=1, limit=10
    $region2: #{tpu_custom_call.1} parent=1 // loop_pre_header
      _
    $region3: #{tpu_custom_call.1} parent=1 // loop_header
      %s24 = sphi 0, %s28
      %p25 = scmp.ge.s32.totalorder %s24, 10
      %s31 = sphi 0, %s43
      %s32 = sphi 0, %s39
      %s33 = sphi 0, %s31
      %s34 = sphi 0, %s32
      %s35 = sphi 0, %s33
      %s36 = sphi 0, %s34
      %s48 = sphi 0, %s50
      %s51 = sphi 0, %s48
      %s52 = sphi 0, %s51
      %s68 = sphi 0, %s52
      %s74 = sphi 0, %s76
      %s77 = sphi 0, %s74
      %s78 = sphi 0, %s77
      %s94 = sphi 0, %s78
      %s98 = sphi 0, %s98
      %s100 = sphi 0, %s98
      %s101 = sphi 0, %s100
      %s115 = sphi 0, %s101
      %s119 = sphi 0, %s119
      %s121 = sphi 0, %s119
      %s122 = sphi 0, %s121
      %s136 = sphi 0, %s122
      %s140 = sphi 0, %s140
      %s142 = sphi 0, %s140
      %s143 = sphi 0, %s142
      %s157 = sphi 0, %s143
      %s161 = sphi 0, %s161
      %s163 = sphi 0, %s161
      %s164 = sphi 0, %s163
      %s178 = sphi 0, %s164
      %s182 = sphi 0, %s182
      %s184 = sphi 0, %s182
      %s185 = sphi 0, %s184
      %s199 = sphi 0, %s185
      %s203 = sphi 0, %s203
      %s205 = sphi 0, %s203
      %s206 = sphi 0, %s205
      %s220 = sphi 0, %s206
      %s228 = sphi 0, %s230
      %s231 = sphi 0, %s228
      %s232 = sphi 0, %s231
      %s248 = sphi 0, %s232
    $region4: #{tpu_custom_call.1} parent=1 // loop_header_branch
      %27 = sbr.rel (%p25) target = $region8
    $region5: #{tpu_custom_call.1} parent=1 // loop_body
      %s29 = ssub.s32 %s24, 1
      %s30 = ssub.s32 %s24, 2
      %s37 = sadd.s32 1, %s32
      %p38 = scmp.ge.s32.totalorder %s37, 4
      %s39 = scalar_select %p38, 0, %s37
      %s40 = sadd.s32 1, %s31
      %s41 = scalar_select %p38, %s40, %s31
      %p42 = scmp.ge.s32.totalorder %s41, 2
      %s43 = scalar_select %p42, 0, %s41
      %s44 = ssub.s32 %s31, %s43
      %s45 = ssub.s32 %s32, %s39
      %s46 = sor.u32 %s44, %s45
      %p47 = scmp.eq.s32.totalorder %s46, 0
      %s49 = sadd.s32 %s48, 1
      %s50 = scalar_select %p47, %s48, %s49
      %p53 = pneg %p47
      %p54 = scmp.eq.s32.totalorder %s24, 7
      %p55 = por %p53, %p54
      %p56 = scmp.ne.s32.totalorder %s48, %s51
      %p57 = scmp.eq.s32.totalorder %s24, 0
      %p58 = por %p56, %p57
      %p59 = scmp.ne.s32.totalorder %s48, %s51
      %p60 = scmp.eq.s32.totalorder %s29, 7
      %p61 = por %p59, %p60
      %p62 = scmp.ne.s32.totalorder %s51, %s52
      %p63 = scmp.eq.s32.totalorder %s29, 0
      %p64 = por %p62, %p63
      %p65 = scmp.ne.s32.totalorder %s51, %s52
      %p66 = scmp.eq.s32.totalorder %s30, 7
      %p67 = por %p65, %p66
      %p69 = scmp.ne.s32.totalorder %s52, %s68
      %p70 = scmp.eq.s32.totalorder %s30, 0
      %p71 = por %p69, %p70
      %s72 = ssub.s32 %s31, %s43
      %p73 = scmp.eq.s32.totalorder %s72, 0
      %s75 = sadd.s32 %s74, 1
      %s76 = scalar_select %p73, %s74, %s75
      %p79 = pneg %p73
      %p80 = scmp.eq.s32.totalorder %s24, 7
      %p81 = por %p79, %p80
      %p82 = scmp.ne.s32.totalorder %s74, %s77
      %p83 = scmp.eq.s32.totalorder %s24, 0
      %p84 = por %p82, %p83
      %p85 = scmp.ne.s32.totalorder %s74, %s77
      %p86 = scmp.eq.s32.totalorder %s29, 7
      %p87 = por %p85, %p86
      %p88 = scmp.ne.s32.totalorder %s77, %s78
      %p89 = scmp.eq.s32.totalorder %s29, 0
      %p90 = por %p88, %p89
      %p91 = scmp.ne.s32.totalorder %s77, %s78
      %p92 = scmp.eq.s32.totalorder %s30, 7
      %p93 = por %p91, %p92
      %p95 = scmp.ne.s32.totalorder %s78, %s94
      %p96 = scmp.eq.s32.totalorder %s30, 0
      %p97 = por %p95, %p96
      %s99 = sadd.s32 %s98, 1
      %p102 = scmp.eq.s32.totalorder %s24, 7
      %p103 = scmp.ne.s32.totalorder %s98, %s100
      %p104 = scmp.eq.s32.totalorder %s24, 0
      %p105 = por %p103, %p104
      %p106 = scmp.ne.s32.totalorder %s98, %s100
      %p107 = scmp.eq.s32.totalorder %s29, 7
      %p108 = por %p106, %p107
      %p109 = scmp.ne.s32.totalorder %s100, %s101
      %p110 = scmp.eq.s32.totalorder %s29, 0
      %p111 = por %p109, %p110
      %p112 = scmp.ne.s32.totalorder %s100, %s101
      %p113 = scmp.eq.s32.totalorder %s30, 7
      %p114 = por %p112, %p113
      %p116 = scmp.ne.s32.totalorder %s101, %s115
      %p117 = scmp.eq.s32.totalorder %s30, 0
      %p118 = por %p116, %p117
      %s120 = sadd.s32 %s119, 1
      %p123 = scmp.eq.s32.totalorder %s24, 7
      %p124 = scmp.ne.s32.totalorder %s119, %s121
      %p125 = scmp.eq.s32.totalorder %s24, 0
      %p126 = por %p124, %p125
      %p127 = scmp.ne.s32.totalorder %s119, %s121
      %p128 = scmp.eq.s32.totalorder %s29, 7
      %p129 = por %p127, %p128
      %p130 = scmp.ne.s32.totalorder %s121, %s122
      %p131 = scmp.eq.s32.totalorder %s29, 0
      %p132 = por %p130, %p131
      %p133 = scmp.ne.s32.totalorder %s121, %s122
      %p134 = scmp.eq.s32.totalorder %s30, 7
      %p135 = por %p133, %p134
      %p137 = scmp.ne.s32.totalorder %s122, %s136
      %p138 = scmp.eq.s32.totalorder %s30, 0
      %p139 = por %p137, %p138
      %s141 = sadd.s32 %s140, 1
      %p144 = scmp.eq.s32.totalorder %s24, 7
      %p145 = scmp.ne.s32.totalorder %s140, %s142
      %p146 = scmp.eq.s32.totalorder %s24, 0
      %p147 = por %p145, %p146
      %p148 = scmp.ne.s32.totalorder %s140, %s142
      %p149 = scmp.eq.s32.totalorder %s29, 7
      %p150 = por %p148, %p149
      %p151 = scmp.ne.s32.totalorder %s142, %s143
      %p152 = scmp.eq.s32.totalorder %s29, 0
      %p153 = por %p151, %p152
      %p154 = scmp.ne.s32.totalorder %s142, %s143
      %p155 = scmp.eq.s32.totalorder %s30, 7
      %p156 = por %p154, %p155
      %p158 = scmp.ne.s32.totalorder %s143, %s157
      %p159 = scmp.eq.s32.totalorder %s30, 0
      %p160 = por %p158, %p159
      %s162 = sadd.s32 %s161, 1
      %p165 = scmp.eq.s32.totalorder %s24, 7
      %p166 = scmp.ne.s32.totalorder %s161, %s163
      %p167 = scmp.eq.s32.totalorder %s24, 0
      %p168 = por %p166, %p167
      %p169 = scmp.ne.s32.totalorder %s161, %s163
      %p170 = scmp.eq.s32.totalorder %s29, 7
      %p171 = por %p169, %p170
      %p172 = scmp.ne.s32.totalorder %s163, %s164
      %p173 = scmp.eq.s32.totalorder %s29, 0
      %p174 = por %p172, %p173
      %p175 = scmp.ne.s32.totalorder %s163, %s164
      %p176 = scmp.eq.s32.totalorder %s30, 7
      %p177 = por %p175, %p176
      %p179 = scmp.ne.s32.totalorder %s164, %s178
      %p180 = scmp.eq.s32.totalorder %s30, 0
      %p181 = por %p179, %p180
      %s183 = sadd.s32 %s182, 1
      %p186 = scmp.eq.s32.totalorder %s24, 7
      %p187 = scmp.ne.s32.totalorder %s182, %s184
      %p188 = scmp.eq.s32.totalorder %s24, 0
      %p189 = por %p187, %p188
      %p190 = scmp.ne.s32.totalorder %s182, %s184
      %p191 = scmp.eq.s32.totalorder %s29, 7
      %p192 = por %p190, %p191
      %p193 = scmp.ne.s32.totalorder %s184, %s185
      %p194 = scmp.eq.s32.totalorder %s29, 0
      %p195 = por %p193, %p194
      %p196 = scmp.ne.s32.totalorder %s184, %s185
      %p197 = scmp.eq.s32.totalorder %s30, 7
      %p198 = por %p196, %p197
      %p200 = scmp.ne.s32.totalorder %s185, %s199
      %p201 = scmp.eq.s32.totalorder %s30, 0
      %p202 = por %p200, %p201
      %s204 = sadd.s32 %s203, 1
      %p207 = scmp.eq.s32.totalorder %s24, 7
      %p208 = scmp.ne.s32.totalorder %s203, %s205
      %p209 = scmp.eq.s32.totalorder %s24, 0
      %p210 = por %p208, %p209
      %p211 = scmp.ne.s32.totalorder %s203, %s205
      %p212 = scmp.eq.s32.totalorder %s29, 7
      %p213 = por %p211, %p212
      %p214 = scmp.ne.s32.totalorder %s205, %s206
      %p215 = scmp.eq.s32.totalorder %s29, 0
      %p216 = por %p214, %p215
      %p217 = scmp.ne.s32.totalorder %s205, %s206
      %p218 = scmp.eq.s32.totalorder %s30, 7
      %p219 = por %p217, %p218
      %p221 = scmp.ne.s32.totalorder %s206, %s220
      %p222 = scmp.eq.s32.totalorder %s30, 0
      %p223 = por %p221, %p222
      %s224 = ssub.s32 %s31, %s43
      %s225 = ssub.s32 %s32, %s39
      %s226 = sor.u32 %s224, %s225
      %p227 = scmp.eq.s32.totalorder %s226, 0
      %s229 = sadd.s32 %s228, 1
      %s230 = scalar_select %p227, %s228, %s229
      %p233 = pneg %p227
      %p234 = scmp.eq.s32.totalorder %s24, 7
      %p235 = por %p233, %p234
      %p236 = scmp.ne.s32.totalorder %s228, %s231
      %p237 = scmp.eq.s32.totalorder %s24, 0
      %p238 = por %p236, %p237
      %p239 = scmp.ne.s32.totalorder %s228, %s231
      %p240 = scmp.eq.s32.totalorder %s29, 7
      %p241 = por %p239, %p240
      %p242 = scmp.ne.s32.totalorder %s231, %s232
      %p243 = scmp.eq.s32.totalorder %s29, 0
      %p244 = por %p242, %p243
      %p245 = scmp.ne.s32.totalorder %s231, %s232
      %p246 = scmp.eq.s32.totalorder %s30, 7
      %p247 = por %p245, %p246
      %p249 = scmp.ne.s32.totalorder %s232, %s248
      %p250 = scmp.eq.s32.totalorder %s30, 0
      %p251 = por %p249, %p250
      %p252 = scmp.le.s32.totalorder 1, %s24
      %p253 = scmp.lt.s32.totalorder %s24, 9
      %p254 = pnand %p252, %p253
      %p255 = pneg %p254
      // Predicated region
      $region9: #{tpu_custom_call.1} parent=5 // pred_check
        _
      $region10: #{tpu_custom_call.1} parent=5 // pred_check_branch
        %257 = sbr.rel (%p254) target = $region12
      $region11: #{tpu_custom_call.1} parent=5 // pred_region
        %s258 = ssub.s32 %s24, 1
        // Predicated region
        $region13: #{tpu_custom_call.1} parent=11 // pred_check
          %p259 = pneg %p111
        $region14: #{tpu_custom_call.1} parent=11 // pred_check_branch
          %261 = sbr.rel (%p259) target = $region16
        $region15: #{tpu_custom_call.1} parent=11 // pred_region
          %s263 = ssub.s32 1024, 1024
          %264 = vsyncadd [#allocation8], %s263
          %s265 = sshll.u32 [#allocation9], 4
          %s266 = int_to_ptr.vmem [resolvable:$true] %s265
          %271 = dma.hbm_to_vmem [thread:$0]  %s2, 1024, %s266, [#allocation8], 64, 64, 4
        $region16: #{tpu_custom_call.1} parent=11 // pred_fallthru
          _
        // Predicated region
        $region17: #{tpu_custom_call.1} parent=11 // pred_check
          %p272 = pneg %p132
        $region18: #{tpu_custom_call.1} parent=11 // pred_check_branch
          %274 = sbr.rel (%p272) target = $region20
        $region19: #{tpu_custom_call.1} parent=11 // pred_region
          _
        $region20: #{tpu_custom_call.1} parent=11 // pred_fallthru
          _
        // Predicated region
        $region21: #{tpu_custom_call.1} parent=11 // pred_check
          %p275 = pneg %p153
        $region22: #{tpu_custom_call.1} parent=11 // pred_check_branch
          %277 = sbr.rel (%p275) target = $region24
        $region23: #{tpu_custom_call.1} parent=11 // pred_region
          %s279 = ssub.s32 2048, 2048
          %280 = vsyncadd [#allocation11], %s279
          %s281 = sshll.u32 [#allocation10], 4
          %s282 = int_to_ptr.vmem [resolvable:$true] %s281
          %287 = dma.hbm_to_vmem [thread:$0]  %s4, 2048, %s282, [#allocation11], 128, 128, 8
        $region24: #{tpu_custom_call.1} parent=11 // pred_fallthru
          _
        // Predicated region
        $region25: #{tpu_custom_call.1} parent=11 // pred_check
          %p288 = pneg %p174
        $region26: #{tpu_custom_call.1} parent=11 // pred_check_branch
          %290 = sbr.rel (%p288) target = $region28
        $region27: #{tpu_custom_call.1} parent=11 // pred_region
          _
        $region28: #{tpu_custom_call.1} parent=11 // pred_fallthru
          _
        // Predicated region
        $region29: #{tpu_custom_call.1} parent=11 // pred_check
          %p291 = pneg %p195
        $region30: #{tpu_custom_call.1} parent=11 // pred_check_branch
          %293 = sbr.rel (%p291) target = $region32
        $region31: #{tpu_custom_call.1} parent=11 // pred_region
          %s295 = ssub.s32 1024, 1024
          %296 = vsyncadd [#allocation11], %s295
          %s297 = sshll.u32 [#allocation12], 4
          %s298 = int_to_ptr.vmem [resolvable:$true] %s297
          %303 = dma.hbm_to_vmem [thread:$0]  %s6, 1024, %s298, [#allocation11], 64, 64, 4
        $region32: #{tpu_custom_call.1} parent=11 // pred_fallthru
          _
        // Predicated region
        $region33: #{tpu_custom_call.1} parent=11 // pred_check
          %p304 = pneg %p216
        $region34: #{tpu_custom_call.1} parent=11 // pred_check_branch
          %306 = sbr.rel (%p304) target = $region36
        $region35: #{tpu_custom_call.1} parent=11 // pred_region
          _
        $region36: #{tpu_custom_call.1} parent=11 // pred_fallthru
          _
      $region12: #{tpu_custom_call.1} parent=5 // pred_fallthru
        _
      %p307 = scmp.lt.s32.totalorder %s24, 8
      // Predicated region
      $region37: #{tpu_custom_call.1} parent=5 // pred_check
        %p308 = pneg %p307
      $region38: #{tpu_custom_call.1} parent=5 // pred_check_branch
        %310 = sbr.rel (%p308) target = $region40
      $region39: #{tpu_custom_call.1} parent=5 // pred_region
        // Predicated region
        $region41: #{tpu_custom_call.1} parent=39 // pred_check
          %p311 = pneg %p58
        $region42: #{tpu_custom_call.1} parent=39 // pred_check_branch
          %313 = sbr.rel (%p311) target = $region44
        $region43: #{tpu_custom_call.1} parent=39 // pred_region
          %s314 = sand.u32 %s48, 1
          %s315 = scalar_lea.sflag [#allocation5], %s314
          %s316 = sand.u32 %s48, 1
          %s317 = smul.addr %s316, 64
          %s318 = scalar_lea.vmem [#allocation4], %s317
          %s319 = smul.u32 8, %s32
          %s321 = ssub.s32 1024, 1024
          %322 = vsyncadd %s315, %s321
          %s323 = smul.addr %s31, 32
          %s324 = sadd.s32 %s319, %s323
          %s325 = smul.addr %s324, 128
          %s326 = scalar_lea.hbm %s0, %s325
          %s327 = sshll.u32 %s318, 4
          %s328 = int_to_ptr.vmem [resolvable:$true] %s327
          %333 = dma.hbm_to_vmem [thread:$0]  %s326, 1024, %s328, %s315, 128, 128, 8
        $region44: #{tpu_custom_call.1} parent=39 // pred_fallthru
          _
        // Predicated region
        $region45: #{tpu_custom_call.1} parent=39 // pred_check
          %p334 = pneg %p84
        $region46: #{tpu_custom_call.1} parent=39 // pred_check_branch
          %336 = sbr.rel (%p334) target = $region48
        $region47: #{tpu_custom_call.1} parent=39 // pred_region
          %s337 = sand.u32 %s24, 1
          %s338 = scalar_lea.sflag [#allocation8], %s337
          %s339 = sand.u32 %s74, 1
          %s340 = smul.addr %s339, 256
          %s341 = scalar_lea.vmem [#allocation7], %s340
          %s343 = ssub.s32 4096, 4096
          %344 = vsyncadd %s338, %s343
          %s345 = smul.addr %s31, 64
          %s346 = smul.addr %s345, 64
          %s347 = scalar_lea.hbm %s1, %s346
          %s348 = sshll.u32 %s341, 4
          %s349 = int_to_ptr.vmem [resolvable:$true] %s348
          %354 = dma.hbm_to_vmem [thread:$0]  %s347, 4096, %s349, %s338, 64, 64, 4
        $region48: #{tpu_custom_call.1} parent=39 // pred_fallthru
          _
      $region40: #{tpu_custom_call.1} parent=5 // pred_fallthru
        _
      %p355 = scmp.le.s32.totalorder 1, %s24
      %p356 = scmp.lt.s32.totalorder %s24, 9
      %p357 = pnand %p355, %p356
      %p358 = pneg %p357
      // Predicated region
      $region49: #{tpu_custom_call.1} parent=5 // pred_check
        _
      $region50: #{tpu_custom_call.1} parent=5 // pred_check_branch
        %360 = sbr.rel (%p357) target = $region52
      $region51: #{tpu_custom_call.1} parent=5 // pred_region
        %s361 = ssub.s32 %s24, 1
        %s362 = sand.u32 %s51, 1
        %s363 = scalar_lea.sflag [#allocation5], %s362
        %s364 = sand.u32 %s51, 1
        %s365 = smul.addr %s364, 64
        %s366 = scalar_lea.vmem [#allocation4], %s365
        // Predicated region
        $region53: #{tpu_custom_call.1} parent=51 // pred_check
          %p367 = pneg %p64
        $region54: #{tpu_custom_call.1} parent=51 // pred_check_branch
          %369 = sbr.rel (%p367) target = $region56
        $region55: #{tpu_custom_call.1} parent=51 // pred_region
          %370 = dma.done %s363, 1024
        $region56: #{tpu_custom_call.1} parent=51 // pred_fallthru
          _
        %s371 = sand.u32 %s29, 1
        %s372 = scalar_lea.sflag [#allocation8], %s371
        %s373 = sand.u32 %s77, 1
        %s374 = smul.addr %s373, 256
        %s375 = scalar_lea.vmem [#allocation7], %s374
        // Predicated region
        $region57: #{tpu_custom_call.1} parent=51 // pred_check
          %p376 = pneg %p90
        $region58: #{tpu_custom_call.1} parent=51 // pred_check_branch
          %378 = sbr.rel (%p376) target = $region60
        $region59: #{tpu_custom_call.1} parent=51 // pred_region
          %379 = dma.done %s372, 4096
        $region60: #{tpu_custom_call.1} parent=51 // pred_fallthru
          _
        // Predicated region
        $region61: #{tpu_custom_call.1} parent=51 // pred_check
          %p380 = pneg %p111
        $region62: #{tpu_custom_call.1} parent=51 // pred_check_branch
          %382 = sbr.rel (%p380) target = $region64
        $region63: #{tpu_custom_call.1} parent=51 // pred_region
          %383 = dma.done [#allocation8], 1024
        $region64: #{tpu_custom_call.1} parent=51 // pred_fallthru
          _
        // Predicated region
        $region65: #{tpu_custom_call.1} parent=51 // pred_check
          %p384 = pneg %p153
        $region66: #{tpu_custom_call.1} parent=51 // pred_check_branch
          %386 = sbr.rel (%p384) target = $region68
        $region67: #{tpu_custom_call.1} parent=51 // pred_region
          %387 = dma.done [#allocation11], 2048
        $region68: #{tpu_custom_call.1} parent=51 // pred_fallthru
          _
        // Predicated region
        $region69: #{tpu_custom_call.1} parent=51 // pred_check
          %p388 = pneg %p195
        $region70: #{tpu_custom_call.1} parent=51 // pred_check_branch
          %390 = sbr.rel (%p388) target = $region72
        $region71: #{tpu_custom_call.1} parent=51 // pred_region
          %391 = dma.done [#allocation11], 1024
        $region72: #{tpu_custom_call.1} parent=51 // pred_fallthru
          _
        %s392 = sand.u32 %s51, 1
        %s393 = scalar_lea.sflag [#allocation5], %s392
        %s394 = sand.u32 %s51, 1
        %s395 = smul.addr %s394, 64
        %s396 = scalar_lea.vmem [#allocation4], %s395
        %p397 = pneg %p64
        %p398 = pneg %p61
        %s399 = sand.u32 %s29, 1
        %s400 = scalar_lea.sflag [#allocation8], %s399
        %s401 = sand.u32 %s77, 1
        %s402 = smul.addr %s401, 256
        %s403 = scalar_lea.vmem [#allocation7], %s402
        %p404 = pneg %p90
        %p405 = pneg %p87
        %p406 = pneg %p111
        %p407 = pneg %p108
        %p408 = pneg %p132
        %p409 = pneg %p129
        %p410 = pneg %p153
        %p411 = pneg %p150
        %p412 = pneg %p174
        %p413 = pneg %p171
        %p414 = pneg %p195
        %p415 = pneg %p192
        %p416 = pneg %p216
        %p417 = pneg %p213
        %p418 = pneg %p244
        %p419 = pneg %p241
        %s420 = sand.u32 %s231, 1
        %s421 = scalar_lea.sflag [#allocation6], %s420
        %s422 = sand.u32 %s231, 1
        %s423 = smul.addr %s422, 64
        %s424 = scalar_lea.vmem [#allocation13], %s423
        %s425 = smul.u32 8, %s34
        %s426 = smul.u32 8, %s34
        %p428 = scmp.eq.s32.totalorder %s34, 0
        // Predicated region
        $region73: #{tpu_custom_call.1} parent=51 // pred_check
          %p429 = pneg %p428
        $region74: #{tpu_custom_call.1} parent=51 // pred_check_branch
          %431 = sbr.rel (%p429) target = $region76
        $region75: #{tpu_custom_call.1} parent=51 // pred_region
          %v432 = vld [vmem:[%s375] sm:$0xf]
          %v433 = vld [vmem:[%s375 + $0x4] sm:$0xf]
          %v434 = vld [vmem:[%s375 + $0x8] sm:$0xf]
          %v435 = vld [vmem:[%s375 + $0xc] sm:$0xf]
          %v436 = vld [vmem:[%s375 + $0x10] sm:$0xf]
          %v437 = vld [vmem:[%s375 + $0x14] sm:$0xf]
          %v438 = vld [vmem:[%s375 + $0x18] sm:$0xf]
          %v439 = vld [vmem:[%s375 + $0x1c] sm:$0xf]
          %v440 = vld [vmem:[%s375 + $0x20] sm:$0xf]
          %v441 = vld [vmem:[%s375 + $0x24] sm:$0xf]
          %v442 = vld [vmem:[%s375 + $0x28] sm:$0xf]
          %v443 = vld [vmem:[%s375 + $0x2c] sm:$0xf]
          %v444 = vld [vmem:[%s375 + $0x30] sm:$0xf]
          %v445 = vld [vmem:[%s375 + $0x34] sm:$0xf]
          %v446 = vld [vmem:[%s375 + $0x38] sm:$0xf]
          %v447 = vld [vmem:[%s375 + $0x3c] sm:$0xf]
          %v448 = vld [vmem:[%s375 + $0x40] sm:$0xf]
          %v449 = vld [vmem:[%s375 + $0x44] sm:$0xf]
          %v450 = vld [vmem:[%s375 + $0x48] sm:$0xf]
          %v451 = vld [vmem:[%s375 + $0x4c] sm:$0xf]
          %v452 = vld [vmem:[%s375 + $0x50] sm:$0xf]
          %v453 = vld [vmem:[%s375 + $0x54] sm:$0xf]
          %v454 = vld [vmem:[%s375 + $0x58] sm:$0xf]
          %v455 = vld [vmem:[%s375 + $0x5c] sm:$0xf]
          %v456 = vld [vmem:[%s375 + $0x60] sm:$0xf]
          %v457 = vld [vmem:[%s375 + $0x64] sm:$0xf]
          %v458 = vld [vmem:[%s375 + $0x68] sm:$0xf]
          %v459 = vld [vmem:[%s375 + $0x6c] sm:$0xf]
          %v460 = vld [vmem:[%s375 + $0x70] sm:$0xf]
          %v461 = vld [vmem:[%s375 + $0x74] sm:$0xf]
          %v462 = vld [vmem:[%s375 + $0x78] sm:$0xf]
          %v463 = vld [vmem:[%s375 + $0x7c] sm:$0xf]
          %v464 = vld [vmem:[%s375 + $0x80] sm:$0xf]
          %v465 = vld [vmem:[%s375 + $0x84] sm:$0xf]
          %v466 = vld [vmem:[%s375 + $0x88] sm:$0xf]
          %v467 = vld [vmem:[%s375 + $0x8c] sm:$0xf]
          %v468 = vld [vmem:[%s375 + $0x90] sm:$0xf]
          %v469 = vld [vmem:[%s375 + $0x94] sm:$0xf]
          %v470 = vld [vmem:[%s375 + $0x98] sm:$0xf]
          %v471 = vld [vmem:[%s375 + $0x9c] sm:$0xf]
          %v472 = vld [vmem:[%s375 + $0xa0] sm:$0xf]
          %v473 = vld [vmem:[%s375 + $0xa4] sm:$0xf]
          %v474 = vld [vmem:[%s375 + $0xa8] sm:$0xf]
          %v475 = vld [vmem:[%s375 + $0xac] sm:$0xf]
          %v476 = vld [vmem:[%s375 + $0xb0] sm:$0xf]
          %v477 = vld [vmem:[%s375 + $0xb4] sm:$0xf]
          %v478 = vld [vmem:[%s375 + $0xb8] sm:$0xf]
          %v479 = vld [vmem:[%s375 + $0xbc] sm:$0xf]
          %v480 = vld [vmem:[%s375 + $0xc0] sm:$0xf]
          %v481 = vld [vmem:[%s375 + $0xc4] sm:$0xf]
          %v482 = vld [vmem:[%s375 + $0xc8] sm:$0xf]
          %v483 = vld [vmem:[%s375 + $0xcc] sm:$0xf]
          %v484 = vld [vmem:[%s375 + $0xd0] sm:$0xf]
          %v485 = vld [vmem:[%s375 + $0xd4] sm:$0xf]
          %v486 = vld [vmem:[%s375 + $0xd8] sm:$0xf]
          %v487 = vld [vmem:[%s375 + $0xdc] sm:$0xf]
          %v488 = vld [vmem:[%s375 + $0xe0] sm:$0xf]
          %v489 = vld [vmem:[%s375 + $0xe4] sm:$0xf]
          %v490 = vld [vmem:[%s375 + $0xe8] sm:$0xf]
          %v491 = vld [vmem:[%s375 + $0xec] sm:$0xf]
          %v492 = vld [vmem:[%s375 + $0xf0] sm:$0xf]
          %v493 = vld [vmem:[%s375 + $0xf4] sm:$0xf]
          %v494 = vld [vmem:[%s375 + $0xf8] sm:$0xf]
          %v495 = vld [vmem:[%s375 + $0xfc] sm:$0xf]
          %v496 = vld [vmem:[#allocation10] sm:$0xff]
          %v497 = vld [vmem:[#allocation10 + $0x8] sm:$0xff]
          %v498 = vld [vmem:[#allocation10 + $0x10] sm:$0xff]
          %v499 = vld [vmem:[#allocation10 + $0x18] sm:$0xff]
          %v500 = vld [vmem:[#allocation10 + $0x20] sm:$0xff]
          %v501 = vld [vmem:[#allocation10 + $0x28] sm:$0xff]
          %v502 = vld [vmem:[#allocation10 + $0x30] sm:$0xff]
          %v503 = vld [vmem:[#allocation10 + $0x38] sm:$0xff]
          %v504 = vld [vmem:[#allocation10 + $0x40] sm:$0xff]
          %v505 = vld [vmem:[#allocation10 + $0x48] sm:$0xff]
          %v506 = vld [vmem:[#allocation10 + $0x50] sm:$0xff]
          %v507 = vld [vmem:[#allocation10 + $0x58] sm:$0xff]
          %v508 = vld [vmem:[#allocation10 + $0x60] sm:$0xff]
          %v509 = vld [vmem:[#allocation10 + $0x68] sm:$0xff]
          %v510 = vld [vmem:[#allocation10 + $0x70] sm:$0xff]
          %v511 = vld [vmem:[#allocation10 + $0x78] sm:$0xff]
          %v576 = vunpack.c.l.b16 %v432
          %v577 = vunpack.c.l.b16 %v433
          %v578 = vunpack.c.l.b16 %v434
          %v579 = vunpack.c.l.b16 %v435
          %v580 = vunpack.c.l.b16 %v436
          %v581 = vunpack.c.l.b16 %v437
          %v582 = vunpack.c.l.b16 %v438
          %v583 = vunpack.c.l.b16 %v439
          %v584 = vunpack.c.l.b16 %v440
          %v585 = vunpack.c.l.b16 %v441
          %v586 = vunpack.c.l.b16 %v442
          %v587 = vunpack.c.l.b16 %v443
          %v588 = vunpack.c.l.b16 %v444
          %v589 = vunpack.c.l.b16 %v445
          %v590 = vunpack.c.l.b16 %v446
          %v591 = vunpack.c.l.b16 %v447
          %v592 = vunpack.c.l.b16 %v448
          %v593 = vunpack.c.l.b16 %v449
          %v594 = vunpack.c.l.b16 %v450
          %v595 = vunpack.c.l.b16 %v451
          %v596 = vunpack.c.l.b16 %v452
          %v597 = vunpack.c.l.b16 %v453
          %v598 = vunpack.c.l.b16 %v454
          %v599 = vunpack.c.l.b16 %v455
          %v600 = vunpack.c.l.b16 %v456
          %v601 = vunpack.c.l.b16 %v457
          %v602 = vunpack.c.l.b16 %v458
          %v603 = vunpack.c.l.b16 %v459
          %v604 = vunpack.c.l.b16 %v460
          %v605 = vunpack.c.l.b16 %v461
          %v606 = vunpack.c.l.b16 %v462
          %v607 = vunpack.c.l.b16 %v463
          %v608 = vunpack.c.l.b16 %v464
          %v609 = vunpack.c.l.b16 %v465
          %v610 = vunpack.c.l.b16 %v466
          %v611 = vunpack.c.l.b16 %v467
          %v612 = vunpack.c.l.b16 %v468
          %v613 = vunpack.c.l.b16 %v469
          %v614 = vunpack.c.l.b16 %v470
          %v615 = vunpack.c.l.b16 %v471
          %v616 = vunpack.c.l.b16 %v472
          %v617 = vunpack.c.l.b16 %v473
          %v618 = vunpack.c.l.b16 %v474
          %v619 = vunpack.c.l.b16 %v475
          %v620 = vunpack.c.l.b16 %v476
          %v621 = vunpack.c.l.b16 %v477
          %v622 = vunpack.c.l.b16 %v478
          %v623 = vunpack.c.l.b16 %v479
          %v624 = vunpack.c.l.b16 %v480
          %v625 = vunpack.c.l.b16 %v481
          %v626 = vunpack.c.l.b16 %v482
          %v627 = vunpack.c.l.b16 %v483
          %v628 = vunpack.c.l.b16 %v484
          %v629 = vunpack.c.l.b16 %v485
          %v630 = vunpack.c.l.b16 %v486
          %v631 = vunpack.c.l.b16 %v487
          %v632 = vunpack.c.l.b16 %v488
          %v633 = vunpack.c.l.b16 %v489
          %v634 = vunpack.c.l.b16 %v490
          %v635 = vunpack.c.l.b16 %v491
          %v636 = vunpack.c.l.b16 %v492
          %v637 = vunpack.c.l.b16 %v493
          %v638 = vunpack.c.l.b16 %v494
          %v639 = vunpack.c.l.b16 %v495
          %v640 = vpack.c.b16 %v577, %v576
          %v641 = vpack.c.b16 %v579, %v578
          %v642 = vpack.c.b16 %v581, %v580
          %v643 = vpack.c.b16 %v583, %v582
          %v644 = vpack.c.b16 %v585, %v584
          %v645 = vpack.c.b16 %v587, %v586
          %v646 = vpack.c.b16 %v589, %v588
          %v647 = vpack.c.b16 %v591, %v590
          %v648 = vpack.c.b16 %v593, %v592
          %v649 = vpack.c.b16 %v595, %v594
          %v650 = vpack.c.b16 %v597, %v596
          %v651 = vpack.c.b16 %v599, %v598
          %v652 = vpack.c.b16 %v601, %v600
          %v653 = vpack.c.b16 %v603, %v602
          %v654 = vpack.c.b16 %v605, %v604
          %v655 = vpack.c.b16 %v607, %v606
          %v656 = vpack.c.b16 %v609, %v608
          %v657 = vpack.c.b16 %v611, %v610
          %v658 = vpack.c.b16 %v613, %v612
          %v659 = vpack.c.b16 %v615, %v614
          %v660 = vpack.c.b16 %v617, %v616
          %v661 = vpack.c.b16 %v619, %v618
          %v662 = vpack.c.b16 %v621, %v620
          %v663 = vpack.c.b16 %v623, %v622
          %v664 = vpack.c.b16 %v625, %v624
          %v665 = vpack.c.b16 %v627, %v626
          %v666 = vpack.c.b16 %v629, %v628
          %v667 = vpack.c.b16 %v631, %v630
          %v668 = vpack.c.b16 %v633, %v632
          %v669 = vpack.c.b16 %v635, %v634
          %v670 = vpack.c.b16 %v637, %v636
          %v671 = vpack.c.b16 %v639, %v638
          %v720 = vunpack.c.l.b16 %v496
          %v721 = vunpack.c.h.b16 %v496
          %v722 = vunpack.c.l.b16 %v497
          %v723 = vunpack.c.h.b16 %v497
          %v724 = vunpack.c.l.b16 %v498
          %v725 = vunpack.c.h.b16 %v498
          %v726 = vunpack.c.l.b16 %v499
          %v727 = vunpack.c.h.b16 %v499
          %v728 = vunpack.c.l.b16 %v500
          %v729 = vunpack.c.h.b16 %v500
          %v730 = vunpack.c.l.b16 %v501
          %v731 = vunpack.c.h.b16 %v501
          %v732 = vunpack.c.l.b16 %v502
          %v733 = vunpack.c.h.b16 %v502
          %v734 = vunpack.c.l.b16 %v503
          %v735 = vunpack.c.h.b16 %v503
          %v736 = vunpack.c.l.b16 %v504
          %v737 = vunpack.c.h.b16 %v504
          %v738 = vunpack.c.l.b16 %v505
          %v739 = vunpack.c.h.b16 %v505
          %v740 = vunpack.c.l.b16 %v506
          %v741 = vunpack.c.h.b16 %v506
          %v742 = vunpack.c.l.b16 %v507
          %v743 = vunpack.c.h.b16 %v507
          %v744 = vunpack.c.l.b16 %v508
          %v745 = vunpack.c.h.b16 %v508
          %v746 = vunpack.c.l.b16 %v509
          %v747 = vunpack.c.h.b16 %v509
          %v748 = vunpack.c.l.b16 %v510
          %v749 = vunpack.c.h.b16 %v510
          %v750 = vunpack.c.l.b16 %v511
          %v751 = vunpack.c.h.b16 %v511
          %v752 = vpack.c.b16 %v722, %v720
          %v753 = vpack.c.b16 %v723, %v721
          %v754 = vpack.c.b16 %v726, %v724
          %v755 = vpack.c.b16 %v727, %v725
          %v756 = vpack.c.b16 %v730, %v728
          %v757 = vpack.c.b16 %v731, %v729
          %v758 = vpack.c.b16 %v734, %v732
          %v759 = vpack.c.b16 %v735, %v733
          %v760 = vpack.c.b16 %v738, %v736
          %v761 = vpack.c.b16 %v739, %v737
          %v762 = vpack.c.b16 %v742, %v740
          %v763 = vpack.c.b16 %v743, %v741
          %v764 = vpack.c.b16 %v746, %v744
          %v765 = vpack.c.b16 %v747, %v745
          %v766 = vpack.c.b16 %v750, %v748
          %v767 = vpack.c.b16 %v751, %v749
          %784 = vmatprep.subr.bf16.mxu0 %v753
          %785 = vmatpush1.bf16.msra.mxu0 %v752
          %786 = vmatprep.subr.bf16.mxu0 %v755
          %787 = vmatpush1.bf16.msra.mxu0 %v754
          %788 = vmatprep.subr.bf16.mxu0 %v757
          %789 = vmatpush1.bf16.msra.mxu0 %v756
          %790 = vmatprep.subr.bf16.mxu0 %v759
          %791 = vmatpush1.bf16.msra.mxu0 %v758
          %792 = vmatprep.subr.bf16.mxu0 %v761
          %793 = vmatpush1.bf16.msra.mxu0 %v760
          %794 = vmatprep.subr.bf16.mxu0 %v763
          %795 = vmatpush1.bf16.msra.mxu0 %v762
          %796 = vmatprep.subr.bf16.mxu0 %v765
          %797 = vmatpush1.bf16.msra.mxu0 %v764
          %798 = vmatprep.subr.bf16.mxu0 %v767
          %799 = vmatpush1.bf16.msra.mxu0 %v766
          %800 = vmatprep.subr.bf16.mxu0 0
          %801 = vmatpush1.bf16.msra.mxu0 0
          %802 = vmatprep.subr.bf16.mxu0 0
          %803 = vmatpush1.bf16.msra.mxu0 0
          %804 = vmatprep.subr.bf16.mxu0 0
          %805 = vmatpush1.bf16.msra.mxu0 0
          %806 = vmatprep.subr.bf16.mxu0 0
          %807 = vmatpush1.bf16.msra.mxu0 0
          %808 = vmatprep.subr.bf16.mxu0 0
          %809 = vmatpush1.bf16.msra.mxu0 0
          %810 = vmatprep.subr.bf16.mxu0 0
          %811 = vmatpush1.bf16.msra.mxu0 0
          %812 = vmatprep.subr.bf16.mxu0 0
          %813 = vmatpush1.bf16.msra.mxu0 0
          %814 = vmatprep.subr.bf16.mxu0 0
          %815 = vmatpush1.bf16.msra.mxu0 0
          %816 = vmatprep.mubr.bf16.mxu0 0
          %817 = vmatmul.mubr.bf16.gmra.mrb[0].mxu0 %v640
          %v818 = vpop.f32.mrb[0].mxu0
          %v819 = vadd.f32 0.0, %v818
          %v820 = vpop.f32.mrb[0].mxu0
          %v821 = vadd.f32 0.0, %v820
          %v822 = vpop.f32.mrb[0].mxu0
          %v823 = vadd.f32 0.0, %v822
          %v824 = vpop.f32.mrb[0].mxu0
          %v825 = vadd.f32 0.0, %v824
          %826 = vmatprep.mubr.bf16.mxu0 0
          %827 = vmatmul.mubr.bf16.gmra.mrb[0].mxu0 %v641
          %v828 = vpop.f32.mrb[0].mxu0
          %v829 = vadd.f32 0.0, %v828
          %v830 = vpop.f32.mrb[0].mxu0
          %v831 = vadd.f32 0.0, %v830
          %v832 = vpop.f32.mrb[0].mxu0
          %v833 = vadd.f32 0.0, %v832
          %v834 = vpop.f32.mrb[0].mxu0
          %v835 = vadd.f32 0.0, %v834
          %836 = vmatprep.mubr.bf16.mxu0 0
          %837 = vmatmul.mubr.bf16.gmra.mrb[0].mxu0 %v642
          %v838 = vpop.f32.mrb[0].mxu0
          %v839 = vadd.f32 0.0, %v838
          %v840 = vpop.f32.mrb[0].mxu0
          %v841 = vadd.f32 0.0, %v840
          %v842 = vpop.f32.mrb[0].mxu0
          %v843 = vadd.f32 0.0, %v842
          %v844 = vpop.f32.mrb[0].mxu0
          %v845 = vadd.f32 0.0, %v844
          %846 = vmatprep.mubr.bf16.mxu0 0
          %847 = vmatmul.mubr.bf16.gmra.mrb[0].mxu0 %v643
          %v848 = vpop.f32.mrb[0].mxu0
          %v849 = vadd.f32 0.0, %v848
          %v850 = vpop.f32.mrb[0].mxu0
          %v851 = vadd.f32 0.0, %v850
          %v852 = vpop.f32.mrb[0].mxu0
          %v853 = vadd.f32 0.0, %v852
          %v854 = vpop.f32.mrb[0].mxu0
          %v855 = vadd.f32 0.0, %v854
          %856 = vmatprep.mubr.bf16.mxu0 0
          %857 = vmatmul.mubr.bf16.gmra.mrb[0].mxu0 %v644
          %v858 = vpop.f32.mrb[0].mxu0
          %v859 = vadd.f32 0.0, %v858
          %v860 = vpop.f32.mrb[0].mxu0
          %v861 = vadd.f32 0.0, %v860
          %v862 = vpop.f32.mrb[0].mxu0
          %v863 = vadd.f32 0.0, %v862
          %v864 = vpop.f32.mrb[0].mxu0
          %v865 = vadd.f32 0.0, %v864
          %866 = vmatprep.mubr.bf16.mxu0 0
          %867 = vmatmul.mubr.bf16.gmra.mrb[0].mxu0 %v645
          %v868 = vpop.f32.mrb[0].mxu0
          %v869 = vadd.f32 0.0, %v868
          %v870 = vpop.f32.mrb[0].mxu0
          %v871 = vadd.f32 0.0, %v870
          %v872 = vpop.f32.mrb[0].mxu0
          %v873 = vadd.f32 0.0, %v872
          %v874 = vpop.f32.mrb[0].mxu0
          %v875 = vadd.f32 0.0, %v874
          %876 = vmatprep.mubr.bf16.mxu0 0
          %877 = vmatmul.mubr.bf16.gmra.mrb[0].mxu0 %v646
          %v878 = vpop.f32.mrb[0].mxu0
          %v879 = vadd.f32 0.0, %v878
          %v880 = vpop.f32.mrb[0].mxu0
          %v881 = vadd.f32 0.0, %v880
          %v882 = vpop.f32.mrb[0].mxu0
          %v883 = vadd.f32 0.0, %v882
          %v884 = vpop.f32.mrb[0].mxu0
          %v885 = vadd.f32 0.0, %v884
          %886 = vmatprep.mubr.bf16.mxu0 0
          %887 = vmatmul.mubr.bf16.gmra.mrb[0].mxu0 %v647
          %v888 = vpop.f32.mrb[0].mxu0
          %v889 = vadd.f32 0.0, %v888
          %v890 = vpop.f32.mrb[0].mxu0
          %v891 = vadd.f32 0.0, %v890
          %v892 = vpop.f32.mrb[0].mxu0
          %v893 = vadd.f32 0.0, %v892
          %v894 = vpop.f32.mrb[0].mxu0
          %v895 = vadd.f32 0.0, %v894
          %896 = vmatprep.mubr.bf16.mxu0 0
          %897 = vmatmul.mubr.bf16.gmra.mrb[0].mxu0 %v648
          %v898 = vpop.f32.mrb[0].mxu0
          %v899 = vadd.f32 0.0, %v898
          %v900 = vpop.f32.mrb[0].mxu0
          %v901 = vadd.f32 0.0, %v900
          %v902 = vpop.f32.mrb[0].mxu0
          %v903 = vadd.f32 0.0, %v902
          %v904 = vpop.f32.mrb[0].mxu0
          %v905 = vadd.f32 0.0, %v904
          %906 = vmatprep.mubr.bf16.mxu0 0
          %907 = vmatmul.mubr.bf16.gmra.mrb[0].mxu0 %v649
          %v908 = vpop.f32.mrb[0].mxu0
          %v909 = vadd.f32 0.0, %v908
          %v910 = vpop.f32.mrb[0].mxu0
          %v911 = vadd.f32 0.0, %v910
          %v912 = vpop.f32.mrb[0].mxu0
          %v913 = vadd.f32 0.0, %v912
          %v914 = vpop.f32.mrb[0].mxu0
          %v915 = vadd.f32 0.0, %v914
          %916 = vmatprep.mubr.bf16.mxu0 0
          %917 = vmatmul.mubr.bf16.gmra.mrb[0].mxu0 %v650
          %v918 = vpop.f32.mrb[0].mxu0
          %v919 = vadd.f32 0.0, %v918
          %v920 = vpop.f32.mrb[0].mxu0
          %v921 = vadd.f32 0.0, %v920
          %v922 = vpop.f32.mrb[0].mxu0
          %v923 = vadd.f32 0.0, %v922
          %v924 = vpop.f32.mrb[0].mxu0
          %v925 = vadd.f32 0.0, %v924
          %926 = vmatprep.mubr.bf16.mxu0 0
          %927 = vmatmul.mubr.bf16.gmra.mrb[0].mxu0 %v651
          %v928 = vpop.f32.mrb[0].mxu0
          %v929 = vadd.f32 0.0, %v928
          %v930 = vpop.f32.mrb[0].mxu0
          %v931 = vadd.f32 0.0, %v930
          %v932 = vpop.f32.mrb[0].mxu0
          %v933 = vadd.f32 0.0, %v932
          %v934 = vpop.f32.mrb[0].mxu0
          %v935 = vadd.f32 0.0, %v934
          %936 = vmatprep.mubr.bf16.mxu0 0
          %937 = vmatmul.mubr.bf16.gmra.mrb[0].mxu0 %v652
          %v938 = vpop.f32.mrb[0].mxu0
          %v939 = vadd.f32 0.0, %v938
          %v940 = vpop.f32.mrb[0].mxu0
          %v941 = vadd.f32 0.0, %v940
          %v942 = vpop.f32.mrb[0].mxu0
          %v943 = vadd.f32 0.0, %v942
          %v944 = vpop.f32.mrb[0].mxu0
          %v945 = vadd.f32 0.0, %v944
          %946 = vmatprep.mubr.bf16.mxu0 0
          %947 = vmatmul.mubr.bf16.gmra.mrb[0].mxu0 %v653
          %v948 = vpop.f32.mrb[0].mxu0
          %v949 = vadd.f32 0.0, %v948
          %v950 = vpop.f32.mrb[0].mxu0
          %v951 = vadd.f32 0.0, %v950
          %v952 = vpop.f32.mrb[0].mxu0
          %v953 = vadd.f32 0.0, %v952
          %v954 = vpop.f32.mrb[0].mxu0
          %v955 = vadd.f32 0.0, %v954
          %956 = vmatprep.mubr.bf16.mxu0 0
          %957 = vmatmul.mubr.bf16.gmra.mrb[0].mxu0 %v654
          %v958 = vpop.f32.mrb[0].mxu0
          %v959 = vadd.f32 0.0, %v958
          %v960 = vpop.f32.mrb[0].mxu0
          %v961 = vadd.f32 0.0, %v960
          %v962 = vpop.f32.mrb[0].mxu0
          %v963 = vadd.f32 0.0, %v962
          %v964 = vpop.f32.mrb[0].mxu0
          %v965 = vadd.f32 0.0, %v964
          %966 = vmatprep.mubr.bf16.mxu0 0
          %967 = vmatmul.mubr.bf16.gmra.mrb[0].mxu0 %v655
          %v968 = vpop.f32.mrb[0].mxu0
          %v969 = vadd.f32 0.0, %v968
          %v970 = vpop.f32.mrb[0].mxu0
          %v971 = vadd.f32 0.0, %v970
          %v972 = vpop.f32.mrb[0].mxu0
          %v973 = vadd.f32 0.0, %v972
          %v974 = vpop.f32.mrb[0].mxu0
          %v975 = vadd.f32 0.0, %v974
          %976 = vmatprep.mubr.bf16.mxu0 0
          %977 = vmatmul.mubr.bf16.gmra.mrb[0].mxu0 %v656
          %v978 = vpop.f32.mrb[0].mxu0
          %v979 = vadd.f32 0.0, %v978
          %v980 = vpop.f32.mrb[0].mxu0
          %v981 = vadd.f32 0.0, %v980
          %v982 = vpop.f32.mrb[0].mxu0
          %v983 = vadd.f32 0.0, %v982
          %v984 = vpop.f32.mrb[0].mxu0
          %v985 = vadd.f32 0.0, %v984
          %986 = vmatprep.mubr.bf16.mxu0 0
          %987 = vmatmul.mubr.bf16.gmra.mrb[0].mxu0 %v657
          %v988 = vpop.f32.mrb[0].mxu0
          %v989 = vadd.f32 0.0, %v988
          %v990 = vpop.f32.mrb[0].mxu0
          %v991 = vadd.f32 0.0, %v990
          %v992 = vpop.f32.mrb[0].mxu0
          %v993 = vadd.f32 0.0, %v992
          %v994 = vpop.f32.mrb[0].mxu0
          %v995 = vadd.f32 0.0, %v994
          %996 = vmatprep.mubr.bf16.mxu0 0
          %997 = vmatmul.mubr.bf16.gmra.mrb[0].mxu0 %v658
          %v998 = vpop.f32.mrb[0].mxu0
          %v999 = vadd.f32 0.0, %v998
          %v1000 = vpop.f32.mrb[0].mxu0
          %v1001 = vadd.f32 0.0, %v1000
          %v1002 = vpop.f32.mrb[0].mxu0
          %v1003 = vadd.f32 0.0, %v1002
          %v1004 = vpop.f32.mrb[0].mxu0
          %v1005 = vadd.f32 0.0, %v1004
          %1006 = vmatprep.mubr.bf16.mxu0 0
          %1007 = vmatmul.mubr.bf16.gmra.mrb[0].mxu0 %v659
          %v1008 = vpop.f32.mrb[0].mxu0
          %v1009 = vadd.f32 0.0, %v1008
          %v1010 = vpop.f32.mrb[0].mxu0
          %v1011 = vadd.f32 0.0, %v1010
          %v1012 = vpop.f32.mrb[0].mxu0
          %v1013 = vadd.f32 0.0, %v1012
          %v1014 = vpop.f32.mrb[0].mxu0
          %v1015 = vadd.f32 0.0, %v1014
          %1016 = vmatprep.mubr.bf16.mxu0 0
          %1017 = vmatmul.mubr.bf16.gmra.mrb[0].mxu0 %v660
          %v1018 = vpop.f32.mrb[0].mxu0
          %v1019 = vadd.f32 0.0, %v1018
          %v1020 = vpop.f32.mrb[0].mxu0
          %v1021 = vadd.f32 0.0, %v1020
          %v1022 = vpop.f32.mrb[0].mxu0
          %v1023 = vadd.f32 0.0, %v1022
          %v1024 = vpop.f32.mrb[0].mxu0
          %v1025 = vadd.f32 0.0, %v1024
          %1026 = vmatprep.mubr.bf16.mxu0 0
          %1027 = vmatmul.mubr.bf16.gmra.mrb[0].mxu0 %v661
          %v1028 = vpop.f32.mrb[0].mxu0
          %v1029 = vadd.f32 0.0, %v1028
          %v1030 = vpop.f32.mrb[0].mxu0
          %v1031 = vadd.f32 0.0, %v1030
          %v1032 = vpop.f32.mrb[0].mxu0
          %v1033 = vadd.f32 0.0, %v1032
          %v1034 = vpop.f32.mrb[0].mxu0
          %v1035 = vadd.f32 0.0, %v1034
          %1036 = vmatprep.mubr.bf16.mxu0 0
          %1037 = vmatmul.mubr.bf16.gmra.mrb[0].mxu0 %v662
          %v1038 = vpop.f32.mrb[0].mxu0
          %v1039 = vadd.f32 0.0, %v1038
          %v1040 = vpop.f32.mrb[0].mxu0
          %v1041 = vadd.f32 0.0, %v1040
          %v1042 = vpop.f32.mrb[0].mxu0
          %v1043 = vadd.f32 0.0, %v1042
          %v1044 = vpop.f32.mrb[0].mxu0
          %v1045 = vadd.f32 0.0, %v1044
          %1046 = vmatprep.mubr.bf16.mxu0 0
          %1047 = vmatmul.mubr.bf16.gmra.mrb[0].mxu0 %v663
          %v1048 = vpop.f32.mrb[0].mxu0
          %v1049 = vadd.f32 0.0, %v1048
          %v1050 = vpop.f32.mrb[0].mxu0
          %v1051 = vadd.f32 0.0, %v1050
          %v1052 = vpop.f32.mrb[0].mxu0
          %v1053 = vadd.f32 0.0, %v1052
          %v1054 = vpop.f32.mrb[0].mxu0
          %v1055 = vadd.f32 0.0, %v1054
          %1056 = vmatprep.mubr.bf16.mxu0 0
          %1057 = vmatmul.mubr.bf16.gmra.mrb[0].mxu0 %v664
          %v1058 = vpop.f32.mrb[0].mxu0
          %v1059 = vadd.f32 0.0, %v1058
          %v1060 = vpop.f32.mrb[0].mxu0
          %v1061 = vadd.f32 0.0, %v1060
          %v1062 = vpop.f32.mrb[0].mxu0
          %v1063 = vadd.f32 0.0, %v1062
          %v1064 = vpop.f32.mrb[0].mxu0
          %v1065 = vadd.f32 0.0, %v1064
          %1066 = vmatprep.mubr.bf16.mxu0 0
          %1067 = vmatmul.mubr.bf16.gmra.mrb[0].mxu0 %v665
          %v1068 = vpop.f32.mrb[0].mxu0
          %v1069 = vadd.f32 0.0, %v1068
          %v1070 = vpop.f32.mrb[0].mxu0
          %v1071 = vadd.f32 0.0, %v1070
          %v1072 = vpop.f32.mrb[0].mxu0
          %v1073 = vadd.f32 0.0, %v1072
          %v1074 = vpop.f32.mrb[0].mxu0
          %v1075 = vadd.f32 0.0, %v1074
          %1076 = vmatprep.mubr.bf16.mxu0 0
          %1077 = vmatmul.mubr.bf16.gmra.mrb[0].mxu0 %v666
          %v1078 = vpop.f32.mrb[0].mxu0
          %v1079 = vadd.f32 0.0, %v1078
          %v1080 = vpop.f32.mrb[0].mxu0
          %v1081 = vadd.f32 0.0, %v1080
          %v1082 = vpop.f32.mrb[0].mxu0
          %v1083 = vadd.f32 0.0, %v1082
          %v1084 = vpop.f32.mrb[0].mxu0
          %v1085 = vadd.f32 0.0, %v1084
          %1086 = vmatprep.mubr.bf16.mxu0 0
          %1087 = vmatmul.mubr.bf16.gmra.mrb[0].mxu0 %v667
          %v1088 = vpop.f32.mrb[0].mxu0
          %v1089 = vadd.f32 0.0, %v1088
          %v1090 = vpop.f32.mrb[0].mxu0
          %v1091 = vadd.f32 0.0, %v1090
          %v1092 = vpop.f32.mrb[0].mxu0
          %v1093 = vadd.f32 0.0, %v1092
          %v1094 = vpop.f32.mrb[0].mxu0
          %v1095 = vadd.f32 0.0, %v1094
          %1096 = vmatprep.mubr.bf16.mxu0 0
          %1097 = vmatmul.mubr.bf16.gmra.mrb[0].mxu0 %v668
          %v1098 = vpop.f32.mrb[0].mxu0
          %v1099 = vadd.f32 0.0, %v1098
          %v1100 = vpop.f32.mrb[0].mxu0
          %v1101 = vadd.f32 0.0, %v1100
          %v1102 = vpop.f32.mrb[0].mxu0
          %v1103 = vadd.f32 0.0, %v1102
          %v1104 = vpop.f32.mrb[0].mxu0
          %v1105 = vadd.f32 0.0, %v1104
          %1106 = vmatprep.mubr.bf16.mxu0 0
          %1107 = vmatmul.mubr.bf16.gmra.mrb[0].mxu0 %v669
          %v1108 = vpop.f32.mrb[0].mxu0
          %v1109 = vadd.f32 0.0, %v1108
          %v1110 = vpop.f32.mrb[0].mxu0
          %v1111 = vadd.f32 0.0, %v1110
          %v1112 = vpop.f32.mrb[0].mxu0
          %v1113 = vadd.f32 0.0, %v1112
          %v1114 = vpop.f32.mrb[0].mxu0
          %v1115 = vadd.f32 0.0, %v1114
          %1116 = vmatprep.mubr.bf16.mxu0 0
          %1117 = vmatmul.mubr.bf16.gmra.mrb[0].mxu0 %v670
          %v1118 = vpop.f32.mrb[0].mxu0
          %v1119 = vadd.f32 0.0, %v1118
          %v1120 = vpop.f32.mrb[0].mxu0
          %v1121 = vadd.f32 0.0, %v1120
          %v1122 = vpop.f32.mrb[0].mxu0
          %v1123 = vadd.f32 0.0, %v1122
          %v1124 = vpop.f32.mrb[0].mxu0
          %v1125 = vadd.f32 0.0, %v1124
          %1126 = vmatprep.mubr.bf16.mxu0 0
          %1127 = vmatmul.mubr.bf16.gmra.mrb[0].mxu0 %v671
          %v1128 = vpop.f32.mrb[0].mxu0
          %v1129 = vadd.f32 0.0, %v1128
          %v1130 = vpop.f32.mrb[0].mxu0
          %v1131 = vadd.f32 0.0, %v1130
          %v1132 = vpop.f32.mrb[0].mxu0
          %v1133 = vadd.f32 0.0, %v1132
          %v1134 = vpop.f32.mrb[0].mxu0
          %v1135 = vadd.f32 0.0, %v1134
          %1136 = vdwg.mxu0
          %v1137 = vmax.f32 %v819, %v899
          %v1138 = vmax.f32 %v821, %v901
          %v1139 = vmax.f32 %v823, %v903
          %v1140 = vmax.f32 %v825, %v905
          %v1141 = vmax.f32 %v829, %v909
          %v1142 = vmax.f32 %v831, %v911
          %v1143 = vmax.f32 %v833, %v913
          %v1144 = vmax.f32 %v835, %v915
          %v1145 = vmax.f32 %v839, %v919
          %v1146 = vmax.f32 %v841, %v921
          %v1147 = vmax.f32 %v843, %v923
          %v1148 = vmax.f32 %v845, %v925
          %v1149 = vmax.f32 %v849, %v929
          %v1150 = vmax.f32 %v851, %v931
          %v1151 = vmax.f32 %v853, %v933
          %v1152 = vmax.f32 %v855, %v935
          %v1153 = vmax.f32 %v859, %v939
          %v1154 = vmax.f32 %v861, %v941
          %v1155 = vmax.f32 %v863, %v943
          %v1156 = vmax.f32 %v865, %v945
          %v1157 = vmax.f32 %v869, %v949
          %v1158 = vmax.f32 %v871, %v951
          %v1159 = vmax.f32 %v873, %v953
          %v1160 = vmax.f32 %v875, %v955
          %v1161 = vmax.f32 %v879, %v959
          %v1162 = vmax.f32 %v881, %v961
          %v1163 = vmax.f32 %v883, %v963
          %v1164 = vmax.f32 %v885, %v965
          %v1165 = vmax.f32 %v889, %v969
          %v1166 = vmax.f32 %v891, %v971
          %v1167 = vmax.f32 %v893, %v973
          %v1168 = vmax.f32 %v895, %v975
          %v1169 = vmax.f32 %v979, %v1059
          %v1170 = vmax.f32 %v981, %v1061
          %v1171 = vmax.f32 %v983, %v1063
          %v1172 = vmax.f32 %v985, %v1065
          %v1173 = vmax.f32 %v989, %v1069
          %v1174 = vmax.f32 %v991, %v1071
          %v1175 = vmax.f32 %v993, %v1073
          %v1176 = vmax.f32 %v995, %v1075
          %v1177 = vmax.f32 %v999, %v1079
          %v1178 = vmax.f32 %v1001, %v1081
          %v1179 = vmax.f32 %v1003, %v1083
          %v1180 = vmax.f32 %v1005, %v1085
          %v1181 = vmax.f32 %v1009, %v1089
          %v1182 = vmax.f32 %v1011, %v1091
          %v1183 = vmax.f32 %v1013, %v1093
          %v1184 = vmax.f32 %v1015, %v1095
          %v1185 = vmax.f32 %v1019, %v1099
          %v1186 = vmax.f32 %v1021, %v1101
          %v1187 = vmax.f32 %v1023, %v1103
          %v1188 = vmax.f32 %v1025, %v1105
          %v1189 = vmax.f32 %v1029, %v1109
          %v1190 = vmax.f32 %v1031, %v1111
          %v1191 = vmax.f32 %v1033, %v1113
          %v1192 = vmax.f32 %v1035, %v1115
          %v1193 = vmax.f32 %v1039, %v1119
          %v1194 = vmax.f32 %v1041, %v1121
          %v1195 = vmax.f32 %v1043, %v1123
          %v1196 = vmax.f32 %v1045, %v1125
          %v1197 = vmax.f32 %v1049, %v1129
          %v1198 = vmax.f32 %v1051, %v1131
          %v1199 = vmax.f32 %v1053, %v1133
          %v1200 = vmax.f32 %v1055, %v1135
          %v1201 = vmax.f32 %v1137, %v1169
          %v1202 = vmax.f32 %v1138, %v1170
          %v1203 = vmax.f32 %v1139, %v1171
          %v1204 = vmax.f32 %v1140, %v1172
          %v1205 = vmax.f32 %v1141, %v1173
          %v1206 = vmax.f32 %v1142, %v1174
          %v1207 = vmax.f32 %v1143, %v1175
          %v1208 = vmax.f32 %v1144, %v1176
          %v1209 = vmax.f32 %v1145, %v1177
          %v1210 = vmax.f32 %v1146, %v1178
          %v1211 = vmax.f32 %v1147, %v1179
          %v1212 = vmax.f32 %v1148, %v1180
          %v1213 = vmax.f32 %v1149, %v1181
          %v1214 = vmax.f32 %v1150, %v1182
          %v1215 = vmax.f32 %v1151, %v1183
          %v1216 = vmax.f32 %v1152, %v1184
          %v1217 = vmax.f32 %v1153, %v1185
          %v1218 = vmax.f32 %v1154, %v1186
          %v1219 = vmax.f32 %v1155, %v1187
          %v1220 = vmax.f32 %v1156, %v1188
          %v1221 = vmax.f32 %v1157, %v1189
          %v1222 = vmax.f32 %v1158, %v1190
          %v1223 = vmax.f32 %v1159, %v1191
          %v1224 = vmax.f32 %v1160, %v1192
          %v1225 = vmax.f32 %v1161, %v1193
          %v1226 = vmax.f32 %v1162, %v1194
          %v1227 = vmax.f32 %v1163, %v1195
          %v1228 = vmax.f32 %v1164, %v1196
          %v1229 = vmax.f32 %v1165, %v1197
          %v1230 = vmax.f32 %v1166, %v1198
          %v1231 = vmax.f32 %v1167, %v1199
          %v1232 = vmax.f32 %v1168, %v1200
          %v1233 = vld [vmem:[%s5] sm:$0x3]
          %v1235 = vlaneseq
          %v1236 = vshrl.u32 %v1235, 7
          %v1237 = vsub.s32 0, %v1236
          %v1238 = vrot.slane %v1233, %v1237
          %v1239 = vlaneseq
          %v1240 = vshrl.u32 %v1239, 7
          %v1241 = vsub.s32 1, %v1240
          %v1242 = vrot.slane %v1233, %v1241
          %v1245 = vadd.f32 %v1201, %v1238
          %v1246 = vadd.f32 %v1202, %v1242
          %v1247 = vadd.f32 %v1203, %v1238
          %v1248 = vadd.f32 %v1204, %v1242
          %v1249 = vadd.f32 %v1205, %v1238
          %v1250 = vadd.f32 %v1206, %v1242
          %v1251 = vadd.f32 %v1207, %v1238
          %v1252 = vadd.f32 %v1208, %v1242
          %v1253 = vadd.f32 %v1209, %v1238
          %v1254 = vadd.f32 %v1210, %v1242
          %v1255 = vadd.f32 %v1211, %v1238
          %v1256 = vadd.f32 %v1212, %v1242
          %v1257 = vadd.f32 %v1213, %v1238
          %v1258 = vadd.f32 %v1214, %v1242
          %v1259 = vadd.f32 %v1215, %v1238
          %v1260 = vadd.f32 %v1216, %v1242
          %v1261 = vadd.f32 %v1217, %v1238
          %v1262 = vadd.f32 %v1218, %v1242
          %v1263 = vadd.f32 %v1219, %v1238
          %v1264 = vadd.f32 %v1220, %v1242
          %v1265 = vadd.f32 %v1221, %v1238
          %v1266 = vadd.f32 %v1222, %v1242
          %v1267 = vadd.f32 %v1223, %v1238
          %v1268 = vadd.f32 %v1224, %v1242
          %v1269 = vadd.f32 %v1225, %v1238
          %v1270 = vadd.f32 %v1226, %v1242
          %v1271 = vadd.f32 %v1227, %v1238
          %v1272 = vadd.f32 %v1228, %v1242
          %v1273 = vadd.f32 %v1229, %v1238
          %v1274 = vadd.f32 %v1230, %v1242
          %v1275 = vadd.f32 %v1231, %v1238
          %v1276 = vadd.f32 %v1232, %v1242
          %v1277 = vpack.c.bf16 %v1247, %v1245
          %v1278 = vpack.c.bf16 %v1248, %v1246
          %v1279 = vpack.c.bf16 %v1251, %v1249
          %v1280 = vpack.c.bf16 %v1252, %v1250
          %v1281 = vpack.c.bf16 %v1255, %v1253
          %v1282 = vpack.c.bf16 %v1256, %v1254
          %v1283 = vpack.c.bf16 %v1259, %v1257
          %v1284 = vpack.c.bf16 %v1260, %v1258
          %v1285 = vpack.c.bf16 %v1263, %v1261
          %v1286 = vpack.c.bf16 %v1264, %v1262
          %v1287 = vpack.c.bf16 %v1267, %v1265
          %v1288 = vpack.c.bf16 %v1268, %v1266
          %v1289 = vpack.c.bf16 %v1271, %v1269
          %v1290 = vpack.c.bf16 %v1272, %v1270
          %v1291 = vpack.c.bf16 %v1275, %v1273
          %v1292 = vpack.c.bf16 %v1276, %v1274
          %1293 = vxpose.xlu0.c.b16.start [1/8] %v1277, 128
          %1294 = vxpose.xlu0.c.b16.cont [2/8] %v1279, 128
          %1295 = vxpose.xlu0.c.b16.cont [3/8] %v1281, 128
          %1296 = vxpose.xlu0.c.b16.cont [4/8] %v1283, 128
          %1297 = vxpose.xlu0.c.b16.cont [5/8] %v1285, 128
          %1298 = vxpose.xlu0.c.b16.cont [6/8] %v1287, 128
          %1299 = vxpose.xlu0.c.b16.cont [7/8] %v1289, 128
          %1300 = vxpose.xlu0.c.b16.end [8/8] %v1291, 128
          %v1301 = vpop.trf.xlu0
          %v1302 = vpop.trf.xlu0
          %v1303 = vpop.trf.xlu0
          %v1304 = vpop.trf.xlu0
          %v1305 = vpop.trf.xlu0
          %v1306 = vpop.trf.xlu0
          %v1307 = vpop.trf.xlu0
          %v1308 = vpop.trf.xlu0
          %1309 = vst [vmem:[#allocation2] sm:$0xff] %v1301
          %1310 = vst [vmem:[#allocation2 + $0x8] sm:$0xff] %v1302
          %1311 = vst [vmem:[#allocation2 + $0x10] sm:$0xff] %v1303
          %1312 = vst [vmem:[#allocation2 + $0x18] sm:$0xff] %v1304
          %1313 = vst [vmem:[#allocation2 + $0x20] sm:$0xff] %v1305
          %1314 = vst [vmem:[#allocation2 + $0x28] sm:$0xff] %v1306
          %1315 = vst [vmem:[#allocation2 + $0x30] sm:$0xff] %v1307
          %1316 = vst [vmem:[#allocation2 + $0x38] sm:$0xff] %v1308
          %1317 = vst [vmem:[#allocation3] sm:$0xff] %v1278
          %1318 = vst [vmem:[#allocation3 + $0x8] sm:$0xff] %v1280
          %1319 = vst [vmem:[#allocation3 + $0x10] sm:$0xff] %v1282
          %1320 = vst [vmem:[#allocation3 + $0x18] sm:$0xff] %v1284
          %1321 = vst [vmem:[#allocation3 + $0x20] sm:$0xff] %v1286
          %1322 = vst [vmem:[#allocation3 + $0x28] sm:$0xff] %v1288
          %1323 = vst [vmem:[#allocation3 + $0x30] sm:$0xff] %v1290
          %1324 = vst [vmem:[#allocation3 + $0x38] sm:$0xff] %v1292
        $region76: #{tpu_custom_call.1} parent=51 // pred_fallthru
          _
        %v1325 = vld [vmem:[%s366] sm:$0xff]
        %v1326 = vld [vmem:[%s366 + $0x8] sm:$0xff]
        %v1327 = vld [vmem:[%s366 + $0x10] sm:$0xff]
        %v1328 = vld [vmem:[%s366 + $0x18] sm:$0xff]
        %v1329 = vld [vmem:[%s366 + $0x20] sm:$0xff]
        %v1330 = vld [vmem:[%s366 + $0x28] sm:$0xff]
        %v1331 = vld [vmem:[%s366 + $0x30] sm:$0xff]
        %v1332 = vld [vmem:[%s366 + $0x38] sm:$0xff]
        %v1333 = vpack.c.bf16 %v1326, %v1325
        %v1334 = vpack.c.bf16 %v1328, %v1327
        %v1335 = vpack.c.bf16 %v1330, %v1329
        %v1336 = vpack.c.bf16 %v1332, %v1331
        %v1337 = vld [vmem:[#allocation9] sm:$0xf]
        %v1338 = vld [vmem:[#allocation9 + $0x4] sm:$0xf]
        %v1339 = vld [vmem:[#allocation9 + $0x8] sm:$0xf]
        %v1340 = vld [vmem:[#allocation9 + $0xc] sm:$0xf]
        %v1341 = vld [vmem:[#allocation9 + $0x10] sm:$0xf]
        %v1342 = vld [vmem:[#allocation9 + $0x14] sm:$0xf]
        %v1343 = vld [vmem:[#allocation9 + $0x18] sm:$0xf]
        %v1344 = vld [vmem:[#allocation9 + $0x1c] sm:$0xf]
        %v1345 = vld [vmem:[#allocation9 + $0x20] sm:$0xf]
        %v1346 = vld [vmem:[#allocation9 + $0x24] sm:$0xf]
        %v1347 = vld [vmem:[#allocation9 + $0x28] sm:$0xf]
        %v1348 = vld [vmem:[#allocation9 + $0x2c] sm:$0xf]
        %v1349 = vld [vmem:[#allocation9 + $0x30] sm:$0xf]
        %v1350 = vld [vmem:[#allocation9 + $0x34] sm:$0xf]
        %v1351 = vld [vmem:[#allocation9 + $0x38] sm:$0xf]
        %v1352 = vld [vmem:[#allocation9 + $0x3c] sm:$0xf]
        %v1353 = vld [vmem:[%s3] sm:$0x1]
        %v1355 = vlaneseq
        %v1356 = vshrl.u32 %v1355, 7
        %v1357 = vsub.s32 0, %v1356
        %v1358 = vrot.slane %v1353, %v1357
        %v1376 = vunpack.c.l.b16 %v1337
        %v1377 = vunpack.c.l.b16 %v1338
        %v1378 = vunpack.c.l.b16 %v1339
        %v1379 = vunpack.c.l.b16 %v1340
        %v1380 = vunpack.c.l.b16 %v1341
        %v1381 = vunpack.c.l.b16 %v1342
        %v1382 = vunpack.c.l.b16 %v1343
        %v1383 = vunpack.c.l.b16 %v1344
        %v1384 = vunpack.c.l.b16 %v1345
        %v1385 = vunpack.c.l.b16 %v1346
        %v1386 = vunpack.c.l.b16 %v1347
        %v1387 = vunpack.c.l.b16 %v1348
        %v1388 = vunpack.c.l.b16 %v1349
        %v1389 = vunpack.c.l.b16 %v1350
        %v1390 = vunpack.c.l.b16 %v1351
        %v1391 = vunpack.c.l.b16 %v1352
        %v1392 = vpack.c.b16 %v1377, %v1376
        %v1393 = vpack.c.b16 %v1379, %v1378
        %v1394 = vpack.c.b16 %v1381, %v1380
        %v1395 = vpack.c.b16 %v1383, %v1382
        %v1396 = vpack.c.b16 %v1385, %v1384
        %v1397 = vpack.c.b16 %v1387, %v1386
        %v1398 = vpack.c.b16 %v1389, %v1388
        %v1399 = vpack.c.b16 %v1391, %v1390
        %1408 = vmatprep.subr.bf16.mxu0 0
        %1409 = vmatpush1.bf16.msra.mxu0 %v1392
        %1410 = vmatprep.subr.bf16.mxu0 0
        %1411 = vmatpush1.bf16.msra.mxu0 %v1393
        %1412 = vmatprep.subr.bf16.mxu0 0
        %1413 = vmatpush1.bf16.msra.mxu0 %v1394
        %1414 = vmatprep.subr.bf16.mxu0 0
        %1415 = vmatpush1.bf16.msra.mxu0 %v1395
        %1416 = vmatprep.subr.bf16.mxu0 0
        %1417 = vmatpush1.bf16.msra.mxu0 %v1396
        %1418 = vmatprep.subr.bf16.mxu0 0
        %1419 = vmatpush1.bf16.msra.mxu0 %v1397
        %1420 = vmatprep.subr.bf16.mxu0 0
        %1421 = vmatpush1.bf16.msra.mxu0 %v1398
        %1422 = vmatprep.subr.bf16.mxu0 0
        %1423 = vmatpush1.bf16.msra.mxu0 %v1399
        %1424 = vmatprep.subr.bf16.mxu0 0
        %1425 = vmatpush1.bf16.msra.mxu0 0
        %1426 = vmatprep.subr.bf16.mxu0 0
        %1427 = vmatpush1.bf16.msra.mxu0 0
        %1428 = vmatprep.subr.bf16.mxu0 0
        %1429 = vmatpush1.bf16.msra.mxu0 0
        %1430 = vmatprep.subr.bf16.mxu0 0
        %1431 = vmatpush1.bf16.msra.mxu0 0
        %1432 = vmatprep.subr.bf16.mxu0 0
        %1433 = vmatpush1.bf16.msra.mxu0 0
        %1434 = vmatprep.subr.bf16.mxu0 0
        %1435 = vmatpush1.bf16.msra.mxu0 0
        %1436 = vmatprep.subr.bf16.mxu0 0
        %1437 = vmatpush1.bf16.msra.mxu0 0
        %1438 = vmatprep.subr.bf16.mxu0 0
        %1439 = vmatpush1.bf16.msra.mxu0 0
        %1440 = vmatprep.mubr.bf16.mxu0 0
        %1441 = vmatmul.mubr.bf16.gmra.mrb[0].mxu0 %v1333
        %v1442 = vpop.f32.mrb[0].mxu0
        %v1443 = vadd.f32 %v1358, %v1442
        %v1444 = vpop.f32.mrb[0].mxu0
        %v1445 = vpop.f32.mrb[0].mxu0
        %v1446 = vadd.f32 %v1358, %v1445
        %v1447 = vpop.f32.mrb[0].mxu0
        %1448 = vmatprep.mubr.bf16.mxu0 0
        %1449 = vmatmul.mubr.bf16.gmra.mrb[0].mxu0 %v1334
        %v1450 = vpop.f32.mrb[0].mxu0
        %v1451 = vadd.f32 %v1358, %v1450
        %v1452 = vpop.f32.mrb[0].mxu0
        %v1453 = vpop.f32.mrb[0].mxu0
        %v1454 = vadd.f32 %v1358, %v1453
        %v1455 = vpop.f32.mrb[0].mxu0
        %1456 = vmatprep.mubr.bf16.mxu0 0
        %1457 = vmatmul.mubr.bf16.gmra.mrb[0].mxu0 %v1335
        %v1458 = vpop.f32.mrb[0].mxu0
        %v1459 = vadd.f32 %v1358, %v1458
        %v1460 = vpop.f32.mrb[0].mxu0
        %v1461 = vpop.f32.mrb[0].mxu0
        %v1462 = vadd.f32 %v1358, %v1461
        %v1463 = vpop.f32.mrb[0].mxu0
        %1464 = vmatprep.mubr.bf16.mxu0 0
        %1465 = vmatmul.mubr.bf16.gmra.mrb[0].mxu0 %v1336
        %v1466 = vpop.f32.mrb[0].mxu0
        %v1467 = vadd.f32 %v1358, %v1466
        %v1468 = vpop.f32.mrb[0].mxu0
        %v1469 = vpop.f32.mrb[0].mxu0
        %v1470 = vadd.f32 %v1358, %v1469
        %v1471 = vpop.f32.mrb[0].mxu0
        %1472 = vdwg.mxu0
        %v1473 = vpack.c.bf16 %v1446, %v1443
        %v1474 = vpack.c.bf16 %v1454, %v1451
        %v1475 = vpack.c.bf16 %v1462, %v1459
        %v1476 = vpack.c.bf16 %v1470, %v1467
        %v1477 = vld [vmem:[#allocation2] sm:$0xff]
        %v1478 = vld [vmem:[#allocation2 + $0x8] sm:$0xff]
        %v1479 = vld [vmem:[#allocation2 + $0x10] sm:$0xff]
        %v1480 = vld [vmem:[#allocation2 + $0x18] sm:$0xff]
        %v1481 = vld [vmem:[#allocation2 + $0x20] sm:$0xff]
        %v1482 = vld [vmem:[#allocation2 + $0x28] sm:$0xff]
        %v1483 = vld [vmem:[#allocation2 + $0x30] sm:$0xff]
        %v1484 = vld [vmem:[#allocation2 + $0x38] sm:$0xff]
        %1485 = vmatprep.subr.bf16.mxu0 0
        %1486 = vmatpush1.bf16.msra.mxu0 %v1477
        %1487 = vmatprep.subr.bf16.mxu0 0
        %1488 = vmatpush1.bf16.msra.mxu0 %v1478
        %1489 = vmatprep.subr.bf16.mxu0 0
        %1490 = vmatpush1.bf16.msra.mxu0 %v1479
        %1491 = vmatprep.subr.bf16.mxu0 0
        %1492 = vmatpush1.bf16.msra.mxu0 %v1480
        %1493 = vmatprep.subr.bf16.mxu0 0
        %1494 = vmatpush1.bf16.msra.mxu0 %v1481
        %1495 = vmatprep.subr.bf16.mxu0 0
        %1496 = vmatpush1.bf16.msra.mxu0 %v1482
        %1497 = vmatprep.subr.bf16.mxu0 0
        %1498 = vmatpush1.bf16.msra.mxu0 %v1483
        %1499 = vmatprep.subr.bf16.mxu0 0
        %1500 = vmatpush1.bf16.msra.mxu0 %v1484
        %1501 = vmatprep.subr.bf16.mxu0 0
        %1502 = vmatpush1.bf16.msra.mxu0 0
        %1503 = vmatprep.subr.bf16.mxu0 0
        %1504 = vmatpush1.bf16.msra.mxu0 0
        %1505 = vmatprep.subr.bf16.mxu0 0
        %1506 = vmatpush1.bf16.msra.mxu0 0
        %1507 = vmatprep.subr.bf16.mxu0 0
        %1508 = vmatpush1.bf16.msra.mxu0 0
        %1509 = vmatprep.subr.bf16.mxu0 0
        %1510 = vmatpush1.bf16.msra.mxu0 0
        %1511 = vmatprep.subr.bf16.mxu0 0
        %1512 = vmatpush1.bf16.msra.mxu0 0
        %1513 = vmatprep.subr.bf16.mxu0 0
        %1514 = vmatpush1.bf16.msra.mxu0 0
        %1515 = vmatprep.subr.bf16.mxu0 0
        %1516 = vmatpush1.bf16.msra.mxu0 0
        %1517 = vmatprep.mubr.bf16.mxu0 0
        %1518 = vmatmul.mubr.bf16.gmra.mrb[0].mxu0 %v1473
        %v1519 = vpop.f32.mrb[0].mxu0
        %v1520 = vadd.f32 0.0, %v1519
        %v1521 = vpop.f32.mrb[0].mxu0
        %v1522 = vpop.f32.mrb[0].mxu0
        %v1523 = vadd.f32 0.0, %v1522
        %v1524 = vpop.f32.mrb[0].mxu0
        %1525 = vmatprep.mubr.bf16.mxu0 0
        %1526 = vmatmul.mubr.bf16.gmra.mrb[0].mxu0 %v1474
        %v1527 = vpop.f32.mrb[0].mxu0
        %v1528 = vadd.f32 0.0, %v1527
        %v1529 = vpop.f32.mrb[0].mxu0
        %v1530 = vpop.f32.mrb[0].mxu0
        %v1531 = vadd.f32 0.0, %v1530
        %v1532 = vpop.f32.mrb[0].mxu0
        %1533 = vmatprep.mubr.bf16.mxu0 0
        %1534 = vmatmul.mubr.bf16.gmra.mrb[0].mxu0 %v1475
        %v1535 = vpop.f32.mrb[0].mxu0
        %v1536 = vadd.f32 0.0, %v1535
        %v1537 = vpop.f32.mrb[0].mxu0
        %v1538 = vpop.f32.mrb[0].mxu0
        %v1539 = vadd.f32 0.0, %v1538
        %v1540 = vpop.f32.mrb[0].mxu0
        %1541 = vmatprep.mubr.bf16.mxu0 0
        %1542 = vmatmul.mubr.bf16.gmra.mrb[0].mxu0 %v1476
        %v1543 = vpop.f32.mrb[0].mxu0
        %v1544 = vadd.f32 0.0, %v1543
        %v1545 = vpop.f32.mrb[0].mxu0
        %v1546 = vpop.f32.mrb[0].mxu0
        %v1547 = vadd.f32 0.0, %v1546
        %v1548 = vpop.f32.mrb[0].mxu0
        %1549 = vdwg.mxu0
        %v1550 = vlaneseq
        %v1551 = vand.u32 %v1550, 127
        %vm1552 = vcmp.lt.s32.totalorder %v1551, 64
        %v1553 = vsel %vm1552, %v1520, -1e+30
        %v1554 = vsel %vm1552, %v1523, -1e+30
        %v1555 = vsel %vm1552, %v1528, -1e+30
        %v1556 = vsel %vm1552, %v1531, -1e+30
        %v1557 = vsel %vm1552, %v1536, -1e+30
        %v1558 = vsel %vm1552, %v1539, -1e+30
        %v1559 = vsel %vm1552, %v1544, -1e+30
        %v1560 = vsel %vm1552, %v1547, -1e+30
        %1561 = vmax.xlane.f32.xlu0 %v1553
        %v1562 = vpop.xlane.xlu0 %1561
        %1563 = vmax.xlane.f32.xlu0 %v1554
        %v1564 = vpop.xlane.xlu0 %1563
        %1565 = vmax.xlane.f32.xlu0 %v1555
        %v1566 = vpop.xlane.xlu0 %1565
        %1567 = vmax.xlane.f32.xlu0 %v1556
        %v1568 = vpop.xlane.xlu0 %1567
        %1569 = vmax.xlane.f32.xlu0 %v1557
        %v1570 = vpop.xlane.xlu0 %1569
        %1571 = vmax.xlane.f32.xlu0 %v1558
        %v1572 = vpop.xlane.xlu0 %1571
        %1573 = vmax.xlane.f32.xlu0 %v1559
        %v1574 = vpop.xlane.xlu0 %1573
        %1575 = vmax.xlane.f32.xlu0 %v1560
        %v1576 = vpop.xlane.xlu0 %1575
        %v1577 = vsub.f32 %v1553, %v1562
        %v1578 = vsub.f32 %v1554, %v1564
        %v1579 = vsub.f32 %v1555, %v1566
        %v1580 = vsub.f32 %v1556, %v1568
        %v1581 = vsub.f32 %v1557, %v1570
        %v1582 = vsub.f32 %v1558, %v1572
        %v1583 = vsub.f32 %v1559, %v1574
        %v1584 = vsub.f32 %v1560, %v1576
        %v1585 = vpack.c.bf16 %v1578, %v1577
        %v1586 = vpack.c.bf16 %v1580, %v1579
        %v1587 = vpack.c.bf16 %v1582, %v1581
        %v1588 = vpack.c.bf16 %v1584, %v1583
        %v1590 = vmul.bf16 %v1585, 1069105081
        %v1591 = vpow.bf16.pop %v1590
        %v1593 = vmul.bf16 %v1586, 1069105081
        %v1594 = vpow.bf16.pop %v1593
        %v1596 = vmul.bf16 %v1587, 1069105081
        %v1597 = vpow.bf16.pop %v1596
        %v1599 = vmul.bf16 %v1588, 1069105081
        %v1600 = vpow.bf16.pop %v1599
        %v1601 = vunpack.c.l.bf16 %v1591
        %v1602 = vunpack.c.h.bf16 %v1591
        %v1603 = vunpack.c.l.bf16 %v1594
        %v1604 = vunpack.c.h.bf16 %v1594
        %v1605 = vunpack.c.l.bf16 %v1597
        %v1606 = vunpack.c.h.bf16 %v1597
        %v1607 = vunpack.c.l.bf16 %v1600
        %v1608 = vunpack.c.h.bf16 %v1600
        %1609 = vadd.xlane.f32.xlu0 %v1601
        %v1610 = vpop.xlane.xlu0 %1609
        %1611 = vadd.xlane.f32.xlu0 %v1602
        %v1612 = vpop.xlane.xlu0 %1611
        %1613 = vadd.xlane.f32.xlu0 %v1603
        %v1614 = vpop.xlane.xlu0 %1613
        %1615 = vadd.xlane.f32.xlu0 %v1604
        %v1616 = vpop.xlane.xlu0 %1615
        %1617 = vadd.xlane.f32.xlu0 %v1605
        %v1618 = vpop.xlane.xlu0 %1617
        %1619 = vadd.xlane.f32.xlu0 %v1606
        %v1620 = vpop.xlane.xlu0 %1619
        %1621 = vadd.xlane.f32.xlu0 %v1607
        %v1622 = vpop.xlane.xlu0 %1621
        %1623 = vadd.xlane.f32.xlu0 %v1608
        %v1624 = vpop.xlane.xlu0 %1623
        %v1625 = vrcp.pop %v1610
        %v1626 = vrcp.pop %v1612
        %v1627 = vrcp.pop %v1614
        %v1628 = vrcp.pop %v1616
        %v1629 = vrcp.pop %v1618
        %v1630 = vrcp.pop %v1620
        %v1631 = vrcp.pop %v1622
        %v1632 = vrcp.pop %v1624
        %v1633 = vld [vmem:[#allocation3] sm:$0xff]
        %v1634 = vld [vmem:[#allocation3 + $0x8] sm:$0xff]
        %v1635 = vld [vmem:[#allocation3 + $0x10] sm:$0xff]
        %v1636 = vld [vmem:[#allocation3 + $0x18] sm:$0xff]
        %v1637 = vld [vmem:[#allocation3 + $0x20] sm:$0xff]
        %v1638 = vld [vmem:[#allocation3 + $0x28] sm:$0xff]
        %v1639 = vld [vmem:[#allocation3 + $0x30] sm:$0xff]
        %v1640 = vld [vmem:[#allocation3 + $0x38] sm:$0xff]
        %1641 = vmatprep.subr.bf16.mxu0 0
        %1642 = vmatpush1.bf16.msra.mxu0 %v1633
        %1643 = vmatprep.subr.bf16.mxu0 0
        %1644 = vmatpush1.bf16.msra.mxu0 %v1634
        %1645 = vmatprep.subr.bf16.mxu0 0
        %1646 = vmatpush1.bf16.msra.mxu0 %v1635
        %1647 = vmatprep.subr.bf16.mxu0 0
        %1648 = vmatpush1.bf16.msra.mxu0 %v1636
        %1649 = vmatprep.subr.bf16.mxu0 0
        %1650 = vmatpush1.bf16.msra.mxu0 %v1637
        %1651 = vmatprep.subr.bf16.mxu0 0
        %1652 = vmatpush1.bf16.msra.mxu0 %v1638
        %1653 = vmatprep.subr.bf16.mxu0 0
        %1654 = vmatpush1.bf16.msra.mxu0 %v1639
        %1655 = vmatprep.subr.bf16.mxu0 0
        %1656 = vmatpush1.bf16.msra.mxu0 %v1640
        %1657 = vmatprep.subr.bf16.mxu0 0
        %1658 = vmatpush1.bf16.msra.mxu0 0
        %1659 = vmatprep.subr.bf16.mxu0 0
        %1660 = vmatpush1.bf16.msra.mxu0 0
        %1661 = vmatprep.subr.bf16.mxu0 0
        %1662 = vmatpush1.bf16.msra.mxu0 0
        %1663 = vmatprep.subr.bf16.mxu0 0
        %1664 = vmatpush1.bf16.msra.mxu0 0
        %1665 = vmatprep.subr.bf16.mxu0 0
        %1666 = vmatpush1.bf16.msra.mxu0 0
        %1667 = vmatprep.subr.bf16.mxu0 0
        %1668 = vmatpush1.bf16.msra.mxu0 0
        %1669 = vmatprep.subr.bf16.mxu0 0
        %1670 = vmatpush1.bf16.msra.mxu0 0
        %1671 = vmatprep.subr.bf16.mxu0 0
        %1672 = vmatpush1.bf16.msra.mxu0 0
        %1673 = vmatprep.mubr.bf16.mxu0 0
        %1674 = vmatmul.mubr.bf16.gmra.mrb[0].mxu0 %v1591
        %v1675 = vpop.f32.mrb[0].mxu0
        %v1676 = vadd.f32 0.0, %v1675
        %v1677 = vpop.f32.mrb[0].mxu0
        %v1678 = vpop.f32.mrb[0].mxu0
        %v1679 = vadd.f32 0.0, %v1678
        %v1680 = vpop.f32.mrb[0].mxu0
        %1681 = vmatprep.mubr.bf16.mxu0 0
        %1682 = vmatmul.mubr.bf16.gmra.mrb[0].mxu0 %v1594
        %v1683 = vpop.f32.mrb[0].mxu0
        %v1684 = vadd.f32 0.0, %v1683
        %v1685 = vpop.f32.mrb[0].mxu0
        %v1686 = vpop.f32.mrb[0].mxu0
        %v1687 = vadd.f32 0.0, %v1686
        %v1688 = vpop.f32.mrb[0].mxu0
        %1689 = vmatprep.mubr.bf16.mxu0 0
        %1690 = vmatmul.mubr.bf16.gmra.mrb[0].mxu0 %v1597
        %v1691 = vpop.f32.mrb[0].mxu0
        %v1692 = vadd.f32 0.0, %v1691
        %v1693 = vpop.f32.mrb[0].mxu0
        %v1694 = vpop.f32.mrb[0].mxu0
        %v1695 = vadd.f32 0.0, %v1694
        %v1696 = vpop.f32.mrb[0].mxu0
        %1697 = vmatprep.mubr.bf16.mxu0 0
        %1698 = vmatmul.mubr.bf16.gmra.mrb[0].mxu0 %v1600
        %v1699 = vpop.f32.mrb[0].mxu0
        %v1700 = vadd.f32 0.0, %v1699
        %v1701 = vpop.f32.mrb[0].mxu0
        %v1702 = vpop.f32.mrb[0].mxu0
        %v1703 = vadd.f32 0.0, %v1702
        %v1704 = vpop.f32.mrb[0].mxu0
        %1705 = vdwg.mxu0
        %v1706 = vmul.f32 %v1676, %v1625
        %v1707 = vmul.f32 %v1679, %v1626
        %v1708 = vmul.f32 %v1684, %v1627
        %v1709 = vmul.f32 %v1687, %v1628
        %v1710 = vmul.f32 %v1692, %v1629
        %v1711 = vmul.f32 %v1695, %v1630
        %v1712 = vmul.f32 %v1700, %v1631
        %v1713 = vmul.f32 %v1703, %v1632
        %v1714 = vpack.c.bf16 %v1707, %v1706
        %v1715 = vpack.c.bf16 %v1709, %v1708
        %v1716 = vpack.c.bf16 %v1711, %v1710
        %v1717 = vpack.c.bf16 %v1713, %v1712
        %v1718 = vld [vmem:[#allocation12] sm:$0xf]
        %v1719 = vld [vmem:[#allocation12 + $0x4] sm:$0xf]
        %v1720 = vld [vmem:[#allocation12 + $0x8] sm:$0xf]
        %v1721 = vld [vmem:[#allocation12 + $0xc] sm:$0xf]
        %v1722 = vld [vmem:[#allocation12 + $0x10] sm:$0xf]
        %v1723 = vld [vmem:[#allocation12 + $0x14] sm:$0xf]
        %v1724 = vld [vmem:[#allocation12 + $0x18] sm:$0xf]
        %v1725 = vld [vmem:[#allocation12 + $0x1c] sm:$0xf]
        %v1726 = vld [vmem:[#allocation12 + $0x20] sm:$0xf]
        %v1727 = vld [vmem:[#allocation12 + $0x24] sm:$0xf]
        %v1728 = vld [vmem:[#allocation12 + $0x28] sm:$0xf]
        %v1729 = vld [vmem:[#allocation12 + $0x2c] sm:$0xf]
        %v1730 = vld [vmem:[#allocation12 + $0x30] sm:$0xf]
        %v1731 = vld [vmem:[#allocation12 + $0x34] sm:$0xf]
        %v1732 = vld [vmem:[#allocation12 + $0x38] sm:$0xf]
        %v1733 = vld [vmem:[#allocation12 + $0x3c] sm:$0xf]
        %v1734 = vld [vmem:[%s7] sm:$0x1]
        %v1736 = vlaneseq
        %v1737 = vshrl.u32 %v1736, 7
        %v1738 = vsub.s32 0, %v1737
        %v1739 = vrot.slane %v1734, %v1738
        %v1757 = vunpack.c.l.b16 %v1718
        %v1758 = vunpack.c.l.b16 %v1719
        %v1759 = vunpack.c.l.b16 %v1720
        %v1760 = vunpack.c.l.b16 %v1721
        %v1761 = vunpack.c.l.b16 %v1722
        %v1762 = vunpack.c.l.b16 %v1723
        %v1763 = vunpack.c.l.b16 %v1724
        %v1764 = vunpack.c.l.b16 %v1725
        %v1765 = vunpack.c.l.b16 %v1726
        %v1766 = vunpack.c.l.b16 %v1727
        %v1767 = vunpack.c.l.b16 %v1728
        %v1768 = vunpack.c.l.b16 %v1729
        %v1769 = vunpack.c.l.b16 %v1730
        %v1770 = vunpack.c.l.b16 %v1731
        %v1771 = vunpack.c.l.b16 %v1732
        %v1772 = vunpack.c.l.b16 %v1733
        %v1773 = vpack.c.b16 %v1758, %v1757
        %v1774 = vpack.c.b16 %v1760, %v1759
        %v1775 = vpack.c.b16 %v1762, %v1761
        %v1776 = vpack.c.b16 %v1764, %v1763
        %v1777 = vpack.c.b16 %v1766, %v1765
        %v1778 = vpack.c.b16 %v1768, %v1767
        %v1779 = vpack.c.b16 %v1770, %v1769
        %v1780 = vpack.c.b16 %v1772, %v1771
        %1789 = vmatprep.subr.bf16.mxu0 0
        %1790 = vmatpush1.bf16.msra.mxu0 %v1773
        %1791 = vmatprep.subr.bf16.mxu0 0
        %1792 = vmatpush1.bf16.msra.mxu0 %v1774
        %1793 = vmatprep.subr.bf16.mxu0 0
        %1794 = vmatpush1.bf16.msra.mxu0 %v1775
        %1795 = vmatprep.subr.bf16.mxu0 0
        %1796 = vmatpush1.bf16.msra.mxu0 %v1776
        %1797 = vmatprep.subr.bf16.mxu0 0
        %1798 = vmatpush1.bf16.msra.mxu0 %v1777
        %1799 = vmatprep.subr.bf16.mxu0 0
        %1800 = vmatpush1.bf16.msra.mxu0 %v1778
        %1801 = vmatprep.subr.bf16.mxu0 0
        %1802 = vmatpush1.bf16.msra.mxu0 %v1779
        %1803 = vmatprep.subr.bf16.mxu0 0
        %1804 = vmatpush1.bf16.msra.mxu0 %v1780
        %1805 = vmatprep.subr.bf16.mxu0 0
        %1806 = vmatpush1.bf16.msra.mxu0 0
        %1807 = vmatprep.subr.bf16.mxu0 0
        %1808 = vmatpush1.bf16.msra.mxu0 0
        %1809 = vmatprep.subr.bf16.mxu0 0
        %1810 = vmatpush1.bf16.msra.mxu0 0
        %1811 = vmatprep.subr.bf16.mxu0 0
        %1812 = vmatpush1.bf16.msra.mxu0 0
        %1813 = vmatprep.subr.bf16.mxu0 0
        %1814 = vmatpush1.bf16.msra.mxu0 0
        %1815 = vmatprep.subr.bf16.mxu0 0
        %1816 = vmatpush1.bf16.msra.mxu0 0
        %1817 = vmatprep.subr.bf16.mxu0 0
        %1818 = vmatpush1.bf16.msra.mxu0 0
        %1819 = vmatprep.subr.bf16.mxu0 0
        %1820 = vmatpush1.bf16.msra.mxu0 0
        %1821 = vmatprep.mubr.bf16.mxu0 0
        %1822 = vmatmul.mubr.bf16.gmra.mrb[0].mxu0 %v1714
        %v1823 = vpop.f32.mrb[0].mxu0
        %v1824 = vadd.f32 %v1739, %v1823
        %v1825 = vpop.f32.mrb[0].mxu0
        %v1826 = vpop.f32.mrb[0].mxu0
        %v1827 = vadd.f32 %v1739, %v1826
        %v1828 = vpop.f32.mrb[0].mxu0
        %1829 = vmatprep.mubr.bf16.mxu0 0
        %1830 = vmatmul.mubr.bf16.gmra.mrb[0].mxu0 %v1715
        %v1831 = vpop.f32.mrb[0].mxu0
        %v1832 = vadd.f32 %v1739, %v1831
        %v1833 = vpop.f32.mrb[0].mxu0
        %v1834 = vpop.f32.mrb[0].mxu0
        %v1835 = vadd.f32 %v1739, %v1834
        %v1836 = vpop.f32.mrb[0].mxu0
        %1837 = vmatprep.mubr.bf16.mxu0 0
        %1838 = vmatmul.mubr.bf16.gmra.mrb[0].mxu0 %v1716
        %v1839 = vpop.f32.mrb[0].mxu0
        %v1840 = vadd.f32 %v1739, %v1839
        %v1841 = vpop.f32.mrb[0].mxu0
        %v1842 = vpop.f32.mrb[0].mxu0
        %v1843 = vadd.f32 %v1739, %v1842
        %v1844 = vpop.f32.mrb[0].mxu0
        %1845 = vmatprep.mubr.bf16.mxu0 0
        %1846 = vmatmul.mubr.bf16.gmra.mrb[0].mxu0 %v1717
        %v1847 = vpop.f32.mrb[0].mxu0
        %v1848 = vadd.f32 %v1739, %v1847
        %v1849 = vpop.f32.mrb[0].mxu0
        %v1850 = vpop.f32.mrb[0].mxu0
        %v1851 = vadd.f32 %v1739, %v1850
        %v1852 = vpop.f32.mrb[0].mxu0
        %1853 = vdwg.mxu0
        %v1854 = vadd.f32 %v1824, %v1325
        %v1855 = vadd.f32 %v1827, %v1326
        %v1856 = vadd.f32 %v1832, %v1327
        %v1857 = vadd.f32 %v1835, %v1328
        %v1858 = vadd.f32 %v1840, %v1329
        %v1859 = vadd.f32 %v1843, %v1330
        %v1860 = vadd.f32 %v1848, %v1331
        %v1861 = vadd.f32 %v1851, %v1332
        %1862 = vst [vmem:[%s424] sm:$0xff] %v1854
        %1863 = vst [vmem:[%s424 + $0x8] sm:$0xff] %v1855
        %1864 = vst [vmem:[%s424 + $0x10] sm:$0xff] %v1856
        %1865 = vst [vmem:[%s424 + $0x18] sm:$0xff] %v1857
        %1866 = vst [vmem:[%s424 + $0x20] sm:$0xff] %v1858
        %1867 = vst [vmem:[%s424 + $0x28] sm:$0xff] %v1859
        %1868 = vst [vmem:[%s424 + $0x30] sm:$0xff] %v1860
        %1869 = vst [vmem:[%s424 + $0x38] sm:$0xff] %v1861
        %s1870 = sand.u32 %s231, 1
        %s1871 = scalar_lea.sflag [#allocation6], %s1870
        %s1872 = sand.u32 %s231, 1
        %s1873 = smul.addr %s1872, 64
        %s1874 = scalar_lea.vmem [#allocation13], %s1873
        // Predicated region
        $region77: #{tpu_custom_call.1} parent=51 // pred_check
          %p1875 = pneg %p241
        $region78: #{tpu_custom_call.1} parent=51 // pred_check_branch
          %1877 = sbr.rel (%p1875) target = $region80
        $region79: #{tpu_custom_call.1} parent=51 // pred_region
          %s1878 = smul.u32 8, %s34
          %s1880 = ssub.s32 1024, 1024
          %1881 = vsyncadd %s1871, %s1880
          %s1882 = smul.addr %s33, 32
          %s1883 = sadd.s32 %s1878, %s1882
          %s1884 = smul.addr %s1883, 128
          %s1885 = scalar_lea.hbm %s8, %s1884
          %s1886 = sshll.u32 %s1874, 4
          %s1887 = int_to_ptr.vmem [resolvable:$true] %s1886
          %1892 = dma.vmem_to_hbm [thread:$0]  %s1887, 1024, %s1885, %s1871, 128, 128, 8
        $region80: #{tpu_custom_call.1} parent=51 // pred_fallthru
          _
      $region52: #{tpu_custom_call.1} parent=5 // pred_fallthru
        _
      %p1893 = scmp.le.s32.totalorder 2, %s24
      // Predicated region
      $region81: #{tpu_custom_call.1} parent=5 // pred_check
        %p1894 = pneg %p1893
      $region82: #{tpu_custom_call.1} parent=5 // pred_check_branch
        %1896 = sbr.rel (%p1894) target = $region84
      $region83: #{tpu_custom_call.1} parent=5 // pred_region
        %s1897 = ssub.s32 %s24, 2
        // Predicated region
        $region85: #{tpu_custom_call.1} parent=83 // pred_check
          %p1898 = pneg %p247
        $region86: #{tpu_custom_call.1} parent=83 // pred_check_branch
          %1900 = sbr.rel (%p1898) target = $region88
        $region87: #{tpu_custom_call.1} parent=83 // pred_region
          %s1901 = sand.u32 %s232, 1
          %s1902 = scalar_lea.sflag [#allocation6], %s1901
          %s1903 = sand.u32 %s232, 1
          %s1904 = smul.addr %s1903, 64
          %s1905 = scalar_lea.vmem [#allocation13], %s1904
          %1906 = dma.done %s1902, 1024
        $region88: #{tpu_custom_call.1} parent=83 // pred_fallthru
          _
      $region84: #{tpu_custom_call.1} parent=5 // pred_fallthru
        _
    $region6: #{tpu_custom_call.1} parent=1 // loop_footer
      %s28 = sadd.s32 1, %s24
    $region7: #{tpu_custom_call.1} parent=1 // loop_footer_branch
      %23 = sbr.rel target = $region3
    $region8: #{tpu_custom_call.1} parent=1 // loop_exit
      _
    %1907 = vsyncpa [#allocation5], 1
    %s1908 = scalar_lea.sflag [#allocation5], 1
    %1909 = vsyncpa %s1908, 1
    %1910 = vsyncpa [#allocation8], 1
    %s1911 = scalar_lea.sflag [#allocation8], 1
    %1912 = vsyncpa %s1911, 1
    %1913 = vsyncpa [#allocation11], 1
    %1914 = vsyncpa [#allocation6], 1
    %s1915 = scalar_lea.sflag [#allocation6], 1
    %1916 = vsyncpa %s1915, 1

</llo_original>
